<compile_context>
chip_gen: v7x
topology: tpu7x:2x2x1
jax: 0.10.0
libtpu: 0.0.40
codegen_flags: <defaults>
</compile_context>

<pallas_src>
import functools

import jax
import jax.numpy as jnp
from jax import lax
from jax.experimental import pallas as pl
from jax.experimental.pallas import tpu as pltpu

KSIZE = 7
PAD = 3


def _conv7x7_sigmoid(avg, mx, w_ref, b_ref, rmask, cmask, o_ref, *, width, hw_pad):
    """7x7 2->1 channel conv (+bias) and sigmoid on flat (Bt, HWp) planes.

    "Column-conv then row-shift": per input channel the 7 column-shifted
    (+cmask'ed) planes are built once (7 lane rolls), the kj weights are folded
    in per ki, and a single row roll + rmask is applied per (c, ki).
    """
    acc = jnp.full(avg.shape, b_ref[0], dtype=jnp.float32)
    ax = avg.ndim - 1
    for c, plane in enumerate((avg, mx)):      # channel order matches cat([avg, max])
        cols = []
        for kj in range(KSIZE):
            dj = kj - PAD
            if dj == 0:
                cols.append(plane)
            else:
                v = pltpu.roll(plane, shift=(-dj) % hw_pad, axis=ax)
                cols.append(v * cmask[kj:kj + 1, :])
        for ki in range(KSIZE):
            di = ki - PAD
            r = cols[0] * w_ref[c * KSIZE * KSIZE + ki * KSIZE + 0]
            for kj in range(1, KSIZE):
                r = r + cols[kj] * w_ref[c * KSIZE * KSIZE + ki * KSIZE + kj]
            if di != 0:
                r = pltpu.roll(r, shift=(-di * width) % hw_pad, axis=ax)
                r = r * rmask[ki:ki + 1, :]
            acc = acc + r
    y = jax.nn.sigmoid(acc)
    o_ref[...] = y.reshape(o_ref.shape).astype(o_ref.dtype)


def _spatial_attention_kernel(w_ref, b_ref, rmask_ref, cmask_ref, x_ref, o_ref,
                              sum_sc, max_sc, *, num_channels, width, hw_pad,
                              single_ct):
    # w_ref:     SMEM (2*7*7,) f32 conv weights, layout [c, ki, kj]
    # b_ref:     SMEM (1,)     f32 conv bias
    # rmask_ref: VMEM (7, HWp) f32 0/1 row-validity masks (one per ki)
    # cmask_ref: VMEM (7, HWp) f32 0/1 col-validity masks (one per kj)
    # x_ref:     VMEM (Bt, Ct, HWp) input block (original dtype)
    # o_ref:     VMEM (Bt, 1, HWp)  f32 output block
    # sum_sc / max_sc: VMEM (Bt, HWp) f32 running channel sum / max
    inv_c = 1.0 / num_channels

    # Channel reduction on this block: f32 accumulation without materializing
    # an f32 copy of the block; max is exact in the input dtype.
    psum = jnp.sum(x_ref[...], axis=1, dtype=jnp.float32)   # (Bt, HWp)
    pmax = jnp.max(x_ref[...], axis=1)                      # (Bt, HWp) in-dtype

    if single_ct:
        # Whole channel extent in one block: no scratch round trips.
        _conv7x7_sigmoid(psum * inv_c, pmax.astype(jnp.float32),
                         w_ref, b_ref, rmask_ref[...], cmask_ref[...], o_ref,
                         width=width, hw_pad=hw_pad)
    else:
        ci = pl.program_id(1)

        @pl.when(ci == 0)
        def _init():
            sum_sc[...] = psum
            max_sc[...] = pmax.astype(jnp.float32)

        @pl.when(ci > 0)
        def _accumulate():
            sum_sc[...] = sum_sc[...] + psum
            max_sc[...] = jnp.maximum(max_sc[...], pmax.astype(jnp.float32))

        @pl.when(ci == pl.num_programs(1) - 1)
        def _finalize():
            _conv7x7_sigmoid(sum_sc[...] * inv_c, max_sc[...],
                             w_ref, b_ref, rmask_ref[...], cmask_ref[...],
                             o_ref, width=width, hw_pad=hw_pad)


def _tpu_params():
    """(physical VMEM bytes, TensorCores per chip) with safe fallbacks."""
    vmem_cap = 128 * 1024 * 1024
    num_tc = 1
    try:
        info = pltpu.get_tpu_info()
        vmem_cap = int(getattr(info, "vmem_capacity_bytes", vmem_cap))
        num_tc = int(getattr(info, "num_cores", num_tc))
    except Exception:
        pass
    return vmem_cap, max(1, num_tc)


def _divisors(n):
    return [d for d in range(1, n + 1) if n % d == 0]


def _choose_tiles(B, C, HWp, itemsize, budget, sub, num_tc):
    """Pick (Bt, Ct) so the (Bt, Ct, HWp) x block fits the VMEM budget."""
    bt = 0
    for d in _divisors(B):
        # Only force >= 2 batch grid steps where a second TensorCore exists.
        if num_tc >= 2 and B >= 2 and B // d < 2:
            continue
        if d * C * HWp * itemsize <= budget:
            bt = max(bt, d)
    if bt:
        return bt, C
    # A single batch row with all channels is too big: tile channels (running
    # sum/max live in VMEM scratch).  Ct must divide C and be a multiple of the
    # packed sublane count (8 f32 / 16 bf16 / 32 int8) to avoid relayouts.
    fitting = [d for d in _divisors(C)
               if d % sub == 0 and d * HWp * itemsize <= budget]
    if fitting:
        return 1, max(fitting)
    aligned = [d for d in _divisors(C) if d % sub == 0]
    return 1, (min(aligned) if aligned else C)


def spatial_attention(x, w, b):
    """x: (B, C, H, W); w: (1, 2, 7, 7) f32; b: (1,) f32 -> (B, 1, H, W) f32."""
    B, C, H, W = x.shape
    HW = H * W
    HWp = max(128, ((HW + 127) // 128) * 128)   # lane-dense flat spatial axis

    x3 = x.reshape(B, C, HW)                    # contiguous reshape, keeps dtype
    if HWp != HW:
        x3 = jnp.pad(x3, ((0, 0), (0, 0), (0, HWp - HW)))
    w_flat = w.reshape(-1).astype(jnp.float32)  # (98,)
    b_flat = b.reshape(-1).astype(jnp.float32)  # (1,)

    # 0/1 boundary masks for the zero-padded 7x7 conv in the flat layout:
    # rmask[ki] kills rows where i + (ki-3) is outside [0,H), cmask[kj] kills
    # cols where j + (kj-3) is outside [0,W); lanes >= H*W are padding.
    p = jnp.arange(HWp, dtype=jnp.int32)
    i_idx = p // W
    j_idx = p % W
    valid = p < HW
    rmask = jnp.stack(
        [valid & (i_idx + (ki - PAD) >= 0) & (i_idx + (ki - PAD) < H)
         for ki in range(KSIZE)]).astype(jnp.float32)      # (7, HWp)
    cmask = jnp.stack(
        [valid & (j_idx + (kj - PAD) >= 0) & (j_idx + (kj - PAD) < W)
         for kj in range(KSIZE)]).astype(jnp.float32)      # (7, HWp)

    itemsize = jnp.dtype(x.dtype).itemsize
    sub = max(8, 32 // itemsize)                            # packed sublanes
    vmem_cap, num_tc = _tpu_params()
    soft_cap = (vmem_cap * 3) // 4          # 96 MiB on 128-MiB parts, 48 MiB on v7x
    block_budget = min(24 << 20, max(2 << 20, (soft_cap - (24 << 20)) // 2))

    Bt, Ct = _choose_tiles(B, C, HWp, itemsize, block_budget, sub, num_tc)
    single_ct = (Ct == C)

    # Declared VMEM follows the actual chosen block (double-buffered) plus the
    # masks / output / scratch and headroom, never the full physical VMEM.
    x_block_bytes = Bt * Ct * HWp * itemsize
    aux_bytes = 2 * KSIZE * HWp * 4 + 4 * Bt * HWp * 4
    vmem_limit = int(min(vmem_cap - (8 << 20),
                         max(32 << 20, 2 * x_block_bytes + aux_bytes + (16 << 20))))

    kernel = functools.partial(_spatial_attention_kernel, num_channels=C,
                               width=W, hw_pad=HWp, single_ct=single_ct)

    out = pl.pallas_call(
        kernel,
        out_shape=jax.ShapeDtypeStruct((B, 1, HWp), jnp.float32),
        grid=(B // Bt, C // Ct),
        in_specs=[
            pl.BlockSpec(memory_space=pltpu.SMEM),                    # conv weights
            pl.BlockSpec(memory_space=pltpu.SMEM),                    # conv bias
            pl.BlockSpec((KSIZE, HWp), lambda bi, ci: (0, 0)),        # row masks
            pl.BlockSpec((KSIZE, HWp), lambda bi, ci: (0, 0)),        # col masks
            pl.BlockSpec((Bt, Ct, HWp), lambda bi, ci: (bi, ci, 0)),  # x block
        ],
        out_specs=pl.BlockSpec((Bt, 1, HWp), lambda bi, ci: (bi, 0, 0)),
        scratch_shapes=[
            pltpu.VMEM((Bt, HWp), jnp.float32),   # running channel sum
            pltpu.VMEM((Bt, HWp), jnp.float32),   # running channel max
        ],
        compiler_params=pltpu.CompilerParams(
            dimension_semantics=("parallel", "arbitrary"),
            vmem_limit_bytes=vmem_limit),
    )(w_flat, b_flat, rmask, cmask, x3)

    if HWp != HW:
        out = out[:, :, :HW]
    return out.reshape(B, 1, H, W)


def _reference(x, w, b):
    """Pure-JAX reference matching the PyTorch module."""
    xf = x.astype(jnp.float32)
    avg = jnp.mean(xf, axis=1, keepdims=True)
    mx = jnp.max(xf, axis=1, keepdims=True)
    stacked = jnp.concatenate([avg, mx], axis=1)            # (B, 2, H, W)
    y = lax.conv_general_dilated(
        stacked, w, window_strides=(1, 1),
        padding=((PAD, PAD), (PAD, PAD)),
        dimension_numbers=("NCHW", "OIHW", "NCHW"))
    return jax.nn.sigmoid(y + b.reshape(1, -1, 1, 1))


if __name__ == "__main__":
    key = jax.random.PRNGKey(0)
    kx, kw, kb, kx2, kx3 = jax.random.split(key, 5)

    # Deterministic "Conv2d(2, 1, 7, padding=3)" parameters.
    fan_in = 2 * KSIZE * KSIZE
    bound = 1.0 / (fan_in ** 0.5)
    w = jax.random.uniform(kw, (1, 2, KSIZE, KSIZE), jnp.float32, -bound, bound)
    b = jax.random.uniform(kb, (1,), jnp.float32, -bound, bound)

    # Case 1: reference shapes (H*W already a multiple of 128).
    B, C, H, W = 2, 4, 16, 16
    x = jax.random.normal(kx, (B, C, H, W), dtype=jnp.float32)
    out = jax.block_until_ready(spatial_attention(x, w, b))
    ref = _reference(x, w, b)
    assert out.shape == (B, 1, H, W)
    assert float(jnp.max(jnp.abs(out - ref))) < 1e-5, "case 1 mismatch vs reference"

    # Case 2: multi-row batch tiles and a lane-padded spatial axis (8*8 -> 128).
    B2, C2, H2, W2 = 8, 16, 8, 8
    x2 = jax.random.normal(kx2, (B2, C2, H2, W2), dtype=jnp.float32)
    out2 = jax.block_until_ready(spatial_attention(x2, w, b))
    ref2 = _reference(x2, w, b)
    assert out2.shape == (B2, 1, H2, W2)
    assert float(jnp.max(jnp.abs(out2 - ref2))) < 1e-5, "case 2 mismatch vs reference"

    # Case 3: bf16 input (f32 sum accumulation without a full-block upcast).
    B3, C3, H3, W3 = 2, 8, 16, 16
    x3 = jax.random.normal(kx3, (B3, C3, H3, W3)).astype(jnp.bfloat16)
    out3 = jax.block_until_ready(spatial_attention(x3, w, b))
    ref3 = _reference(x3, w, b)
    assert out3.shape == (B3, 1, H3, W3)
    assert float(jnp.max(jnp.abs(out3 - ref3))) < 1e-3, "case 3 mismatch vs reference"

    print("KERNEL_OK")
</pallas_src>

<mosaic_0001>
module attributes {stable_mosaic.version = 11 : i64} {
  func.func @_spatial_attention_kernel(%arg0: i32, %arg1: i32, %arg2: memref<98xf32, #tpu.memory_space<smem>>, %arg3: memref<1xf32, #tpu.memory_space<smem>>, %arg4: memref<7x256xf32, #tpu.memory_space<vmem>>, %arg5: memref<7x256xf32, #tpu.memory_space<vmem>>, %arg6: memref<2x4x256xf32, #tpu.memory_space<vmem>>, %arg7: memref<2x1x256xf32, #tpu.memory_space<vmem>>, %arg8: memref<2x256xf32, #tpu.memory_space<vmem>>, %arg9: memref<2x256xf32, #tpu.memory_space<vmem>>) attributes {dimension_semantics = [#tpu.dimension_semantics<parallel>, #tpu.dimension_semantics<arbitrary>], iteration_bounds = array<i64: 1, 1>, scalar_prefetch = 0 : i64, scratch_operands = 2 : i64, tpu.core_type = #tpu.core_type<tc>, window_params = [{transform_indices = @transform_0, window_bounds = array<i64: 98>}, {transform_indices = @transform_1, window_bounds = array<i64: 1>}, {pipeline_mode = #tpu.pipeline_mode<synchronous>, transform_indices = @transform_2, window_bounds = array<i64: 7, 256>}, {pipeline_mode = #tpu.pipeline_mode<synchronous>, transform_indices = @transform_3, window_bounds = array<i64: 7, 256>}, {transform_indices = @transform_4, window_bounds = array<i64: 2, 4, 256>}, {transform_indices = @transform_5, window_bounds = array<i64: 2, 1, 256>}]} {
    %c0 = arith.constant 0 : index
    %c0_0 = arith.constant 0 : index
    %c0_1 = arith.constant 0 : index
    %0 = vector.load %arg6[%c0, %c0_0, %c0_1] : memref<2x4x256xf32, #tpu.memory_space<vmem>>, vector<2x4x256xf32>
    %cst = arith.constant dense<0.000000e+00> : vector<2x256xf32>
    %1 = vector.multi_reduction <add>, %0, %cst [1] : vector<2x4x256xf32> to vector<2x256xf32>
    %c0_2 = arith.constant 0 : index
    %c0_3 = arith.constant 0 : index
    %c0_4 = arith.constant 0 : index
    %2 = vector.load %arg6[%c0_2, %c0_3, %c0_4] : memref<2x4x256xf32, #tpu.memory_space<vmem>>, vector<2x4x256xf32>
    %cst_5 = arith.constant dense<0xFF800000> : vector<2x256xf32>
    %3 = vector.multi_reduction <maximumf>, %2, %cst_5 [1] : vector<2x4x256xf32> to vector<2x256xf32>
    %cst_6 = arith.constant 2.500000e-01 : f32
    %4 = vector.broadcast %cst_6 : f32 to vector<2x256xf32>
    %5 = arith.mulf %1, %4 : vector<2x256xf32>
    %c0_7 = arith.constant 0 : index
    %c0_8 = arith.constant 0 : index
    %6 = vector.load %arg4[%c0_7, %c0_8] : memref<7x256xf32, #tpu.memory_space<vmem>>, vector<7x256xf32>
    %c0_9 = arith.constant 0 : index
    %c0_10 = arith.constant 0 : index
    %7 = vector.load %arg5[%c0_9, %c0_10] : memref<7x256xf32, #tpu.memory_space<vmem>>, vector<7x256xf32>
    %c0_11 = arith.constant 0 : index
    %8 = memref.load %arg3[%c0_11] : memref<1xf32, #tpu.memory_space<smem>>
    %9 = vector.broadcast %8 : f32 to vector<2x256xf32>
    %c3_i32 = arith.constant 3 : i32
    %10 = tpu.dynamic_rotate %5 by %c3_i32 dim 1 : vector<2x256xf32>, i32 -> vector<2x256xf32>
    %11 = vector.extract_strided_slice %7 {offsets = [0, 0], sizes = [1, 256], strides = [1, 1]} : vector<7x256xf32> to vector<1x256xf32>
    %12 = vector.broadcast %11 : vector<1x256xf32> to vector<2x256xf32>
    %13 = arith.mulf %10, %12 : vector<2x256xf32>
    %c2_i32 = arith.constant 2 : i32
    %14 = tpu.dynamic_rotate %5 by %c2_i32 dim 1 : vector<2x256xf32>, i32 -> vector<2x256xf32>
    %15 = vector.extract_strided_slice %7 {offsets = [1, 0], sizes = [1, 256], strides = [1, 1]} : vector<7x256xf32> to vector<1x256xf32>
    %16 = vector.broadcast %15 : vector<1x256xf32> to vector<2x256xf32>
    %17 = arith.mulf %14, %16 : vector<2x256xf32>
    %c1_i32 = arith.constant 1 : i32
    %18 = tpu.dynamic_rotate %5 by %c1_i32 dim 1 : vector<2x256xf32>, i32 -> vector<2x256xf32>
    %19 = vector.extract_strided_slice %7 {offsets = [2, 0], sizes = [1, 256], strides = [1, 1]} : vector<7x256xf32> to vector<1x256xf32>
    %20 = vector.broadcast %19 : vector<1x256xf32> to vector<2x256xf32>
    %21 = arith.mulf %18, %20 : vector<2x256xf32>
    %c255_i32 = arith.constant 255 : i32
    %22 = tpu.dynamic_rotate %5 by %c255_i32 dim 1 : vector<2x256xf32>, i32 -> vector<2x256xf32>
    %23 = vector.extract_strided_slice %7 {offsets = [4, 0], sizes = [1, 256], strides = [1, 1]} : vector<7x256xf32> to vector<1x256xf32>
    %24 = vector.broadcast %23 : vector<1x256xf32> to vector<2x256xf32>
    %25 = arith.mulf %22, %24 : vector<2x256xf32>
    %c254_i32 = arith.constant 254 : i32
    %26 = tpu.dynamic_rotate %5 by %c254_i32 dim 1 : vector<2x256xf32>, i32 -> vector<2x256xf32>
    %27 = vector.extract_strided_slice %7 {offsets = [5, 0], sizes = [1, 256], strides = [1, 1]} : vector<7x256xf32> to vector<1x256xf32>
    %28 = vector.broadcast %27 : vector<1x256xf32> to vector<2x256xf32>
    %29 = arith.mulf %26, %28 : vector<2x256xf32>
    %c253_i32 = arith.constant 253 : i32
    %30 = tpu.dynamic_rotate %5 by %c253_i32 dim 1 : vector<2x256xf32>, i32 -> vector<2x256xf32>
    %31 = vector.extract_strided_slice %7 {offsets = [6, 0], sizes = [1, 256], strides = [1, 1]} : vector<7x256xf32> to vector<1x256xf32>
    %32 = vector.broadcast %31 : vector<1x256xf32> to vector<2x256xf32>
    %33 = arith.mulf %30, %32 : vector<2x256xf32>
    %c0_12 = arith.constant 0 : index
    %34 = memref.load %arg2[%c0_12] : memref<98xf32, #tpu.memory_space<smem>>
    %35 = vector.broadcast %34 : f32 to vector<2x256xf32>
    %36 = arith.mulf %13, %35 : vector<2x256xf32>
    %c1 = arith.constant 1 : index
    %37 = memref.load %arg2[%c1] : memref<98xf32, #tpu.memory_space<smem>>
    %38 = vector.broadcast %37 : f32 to vector<2x256xf32>
    %39 = arith.mulf %17, %38 : vector<2x256xf32>
    %40 = arith.addf %36, %39 : vector<2x256xf32>
    %c2 = arith.constant 2 : index
    %41 = memref.load %arg2[%c2] : memref<98xf32, #tpu.memory_space<smem>>
    %42 = vector.broadcast %41 : f32 to vector<2x256xf32>
    %43 = arith.mulf %21, %42 : vector<2x256xf32>
    %44 = arith.addf %40, %43 : vector<2x256xf32>
    %c3 = arith.constant 3 : index
    %45 = memref.load %arg2[%c3] : memref<98xf32, #tpu.memory_space<smem>>
    %46 = vector.broadcast %45 : f32 to vector<2x256xf32>
    %47 = arith.mulf %5, %46 : vector<2x256xf32>
    %48 = arith.addf %44, %47 : vector<2x256xf32>
    %c4 = arith.constant 4 : index
    %49 = memref.load %arg2[%c4] : memref<98xf32, #tpu.memory_space<smem>>
    %50 = vector.broadcast %49 : f32 to vector<2x256xf32>
    %51 = arith.mulf %25, %50 : vector<2x256xf32>
    %52 = arith.addf %48, %51 : vector<2x256xf32>
    %c5 = arith.constant 5 : index
    %53 = memref.load %arg2[%c5] : memref<98xf32, #tpu.memory_space<smem>>
    %54 = vector.broadcast %53 : f32 to vector<2x256xf32>
    %55 = arith.mulf %29, %54 : vector<2x256xf32>
    %56 = arith.addf %52, %55 : vector<2x256xf32>
    %c6 = arith.constant 6 : index
    %57 = memref.load %arg2[%c6] : memref<98xf32, #tpu.memory_space<smem>>
    %58 = vector.broadcast %57 : f32 to vector<2x256xf32>
    %59 = arith.mulf %33, %58 : vector<2x256xf32>
    %60 = arith.addf %56, %59 : vector<2x256xf32>
    %c48_i32 = arith.constant 48 : i32
    %61 = tpu.dynamic_rotate %60 by %c48_i32 dim 1 : vector<2x256xf32>, i32 -> vector<2x256xf32>
    %62 = vector.extract_strided_slice %6 {offsets = [0, 0], sizes = [1, 256], strides = [1, 1]} : vector<7x256xf32> to vector<1x256xf32>
    %63 = vector.broadcast %62 : vector<1x256xf32> to vector<2x256xf32>
    %64 = arith.mulf %61, %63 : vector<2x256xf32>
    %65 = arith.addf %9, %64 : vector<2x256xf32>
    %c7 = arith.constant 7 : index
    %66 = memref.load %arg2[%c7] : memref<98xf32, #tpu.memory_space<smem>>
    %67 = vector.broadcast %66 : f32 to vector<2x256xf32>
    %68 = arith.mulf %13, %67 : vector<2x256xf32>
    %c8 = arith.constant 8 : index
    %69 = memref.load %arg2[%c8] : memref<98xf32, #tpu.memory_space<smem>>
    %70 = vector.broadcast %69 : f32 to vector<2x256xf32>
    %71 = arith.mulf %17, %70 : vector<2x256xf32>
    %72 = arith.addf %68, %71 : vector<2x256xf32>
    %c9 = arith.constant 9 : index
    %73 = memref.load %arg2[%c9] : memref<98xf32, #tpu.memory_space<smem>>
    %74 = vector.broadcast %73 : f32 to vector<2x256xf32>
    %75 = arith.mulf %21, %74 : vector<2x256xf32>
    %76 = arith.addf %72, %75 : vector<2x256xf32>
    %c10 = arith.constant 10 : index
    %77 = memref.load %arg2[%c10] : memref<98xf32, #tpu.memory_space<smem>>
    %78 = vector.broadcast %77 : f32 to vector<2x256xf32>
    %79 = arith.mulf %5, %78 : vector<2x256xf32>
    %80 = arith.addf %76, %79 : vector<2x256xf32>
    %c11 = arith.constant 11 : index
    %81 = memref.load %arg2[%c11] : memref<98xf32, #tpu.memory_space<smem>>
    %82 = vector.broadcast %81 : f32 to vector<2x256xf32>
    %83 = arith.mulf %25, %82 : vector<2x256xf32>
    %84 = arith.addf %80, %83 : vector<2x256xf32>
    %c12 = arith.constant 12 : index
    %85 = memref.load %arg2[%c12] : memref<98xf32, #tpu.memory_space<smem>>
    %86 = vector.broadcast %85 : f32 to vector<2x256xf32>
    %87 = arith.mulf %29, %86 : vector<2x256xf32>
    %88 = arith.addf %84, %87 : vector<2x256xf32>
    %c13 = arith.constant 13 : index
    %89 = memref.load %arg2[%c13] : memref<98xf32, #tpu.memory_space<smem>>
    %90 = vector.broadcast %89 : f32 to vector<2x256xf32>
    %91 = arith.mulf %33, %90 : vector<2x256xf32>
    %92 = arith.addf %88, %91 : vector<2x256xf32>
    %c32_i32 = arith.constant 32 : i32
    %93 = tpu.dynamic_rotate %92 by %c32_i32 dim 1 : vector<2x256xf32>, i32 -> vector<2x256xf32>
    %94 = vector.extract_strided_slice %6 {offsets = [1, 0], sizes = [1, 256], strides = [1, 1]} : vector<7x256xf32> to vector<1x256xf32>
    %95 = vector.broadcast %94 : vector<1x256xf32> to vector<2x256xf32>
    %96 = arith.mulf %93, %95 : vector<2x256xf32>
    %97 = arith.addf %65, %96 : vector<2x256xf32>
    %c14 = arith.constant 14 : index
    %98 = memref.load %arg2[%c14] : memref<98xf32, #tpu.memory_space<smem>>
    %99 = vector.broadcast %98 : f32 to vector<2x256xf32>
    %100 = arith.mulf %13, %99 : vector<2x256xf32>
    %c15 = arith.constant 15 : index
    %101 = memref.load %arg2[%c15] : memref<98xf32, #tpu.memory_space<smem>>
    %102 = vector.broadcast %101 : f32 to vector<2x256xf32>
    %103 = arith.mulf %17, %102 : vector<2x256xf32>
    %104 = arith.addf %100, %103 : vector<2x256xf32>
    %c16 = arith.constant 16 : index
    %105 = memref.load %arg2[%c16] : memref<98xf32, #tpu.memory_space<smem>>
    %106 = vector.broadcast %105 : f32 to vector<2x256xf32>
    %107 = arith.mulf %21, %106 : vector<2x256xf32>
    %108 = arith.addf %104, %107 : vector<2x256xf32>
    %c17 = arith.constant 17 : index
    %109 = memref.load %arg2[%c17] : memref<98xf32, #tpu.memory_space<smem>>
    %110 = vector.broadcast %109 : f32 to vector<2x256xf32>
    %111 = arith.mulf %5, %110 : vector<2x256xf32>
    %112 = arith.addf %108, %111 : vector<2x256xf32>
    %c18 = arith.constant 18 : index
    %113 = memref.load %arg2[%c18] : memref<98xf32, #tpu.memory_space<smem>>
    %114 = vector.broadcast %113 : f32 to vector<2x256xf32>
    %115 = arith.mulf %25, %114 : vector<2x256xf32>
    %116 = arith.addf %112, %115 : vector<2x256xf32>
    %c19 = arith.constant 19 : index
    %117 = memref.load %arg2[%c19] : memref<98xf32, #tpu.memory_space<smem>>
    %118 = vector.broadcast %117 : f32 to vector<2x256xf32>
    %119 = arith.mulf %29, %118 : vector<2x256xf32>
    %120 = arith.addf %116, %119 : vector<2x256xf32>
    %c20 = arith.constant 20 : index
    %121 = memref.load %arg2[%c20] : memref<98xf32, #tpu.memory_space<smem>>
    %122 = vector.broadcast %121 : f32 to vector<2x256xf32>
    %123 = arith.mulf %33, %122 : vector<2x256xf32>
    %124 = arith.addf %120, %123 : vector<2x256xf32>
    %c16_i32 = arith.constant 16 : i32
    %125 = tpu.dynamic_rotate %124 by %c16_i32 dim 1 : vector<2x256xf32>, i32 -> vector<2x256xf32>
    %126 = vector.extract_strided_slice %6 {offsets = [2, 0], sizes = [1, 256], strides = [1, 1]} : vector<7x256xf32> to vector<1x256xf32>
    %127 = vector.broadcast %126 : vector<1x256xf32> to vector<2x256xf32>
    %128 = arith.mulf %125, %127 : vector<2x256xf32>
    %129 = arith.addf %97, %128 : vector<2x256xf32>
    %c21 = arith.constant 21 : index
    %130 = memref.load %arg2[%c21] : memref<98xf32, #tpu.memory_space<smem>>
    %131 = vector.broadcast %130 : f32 to vector<2x256xf32>
    %132 = arith.mulf %13, %131 : vector<2x256xf32>
    %c22 = arith.constant 22 : index
    %133 = memref.load %arg2[%c22] : memref<98xf32, #tpu.memory_space<smem>>
    %134 = vector.broadcast %133 : f32 to vector<2x256xf32>
    %135 = arith.mulf %17, %134 : vector<2x256xf32>
    %136 = arith.addf %132, %135 : vector<2x256xf32>
    %c23 = arith.constant 23 : index
    %137 = memref.load %arg2[%c23] : memref<98xf32, #tpu.memory_space<smem>>
    %138 = vector.broadcast %137 : f32 to vector<2x256xf32>
    %139 = arith.mulf %21, %138 : vector<2x256xf32>
    %140 = arith.addf %136, %139 : vector<2x256xf32>
    %c24 = arith.constant 24 : index
    %141 = memref.load %arg2[%c24] : memref<98xf32, #tpu.memory_space<smem>>
    %142 = vector.broadcast %141 : f32 to vector<2x256xf32>
    %143 = arith.mulf %5, %142 : vector<2x256xf32>
    %144 = arith.addf %140, %143 : vector<2x256xf32>
    %c25 = arith.constant 25 : index
    %145 = memref.load %arg2[%c25] : memref<98xf32, #tpu.memory_space<smem>>
    %146 = vector.broadcast %145 : f32 to vector<2x256xf32>
    %147 = arith.mulf %25, %146 : vector<2x256xf32>
    %148 = arith.addf %144, %147 : vector<2x256xf32>
    %c26 = arith.constant 26 : index
    %149 = memref.load %arg2[%c26] : memref<98xf32, #tpu.memory_space<smem>>
    %150 = vector.broadcast %149 : f32 to vector<2x256xf32>
    %151 = arith.mulf %29, %150 : vector<2x256xf32>
    %152 = arith.addf %148, %151 : vector<2x256xf32>
    %c27 = arith.constant 27 : index
    %153 = memref.load %arg2[%c27] : memref<98xf32, #tpu.memory_space<smem>>
    %154 = vector.broadcast %153 : f32 to vector<2x256xf32>
    %155 = arith.mulf %33, %154 : vector<2x256xf32>
    %156 = arith.addf %152, %155 : vector<2x256xf32>
    %157 = arith.addf %129, %156 : vector<2x256xf32>
    %c28 = arith.constant 28 : index
    %158 = memref.load %arg2[%c28] : memref<98xf32, #tpu.memory_space<smem>>
    %159 = vector.broadcast %158 : f32 to vector<2x256xf32>
    %160 = arith.mulf %13, %159 : vector<2x256xf32>
    %c29 = arith.constant 29 : index
    %161 = memref.load %arg2[%c29] : memref<98xf32, #tpu.memory_space<smem>>
    %162 = vector.broadcast %161 : f32 to vector<2x256xf32>
    %163 = arith.mulf %17, %162 : vector<2x256xf32>
    %164 = arith.addf %160, %163 : vector<2x256xf32>
    %c30 = arith.constant 30 : index
    %165 = memref.load %arg2[%c30] : memref<98xf32, #tpu.memory_space<smem>>
    %166 = vector.broadcast %165 : f32 to vector<2x256xf32>
    %167 = arith.mulf %21, %166 : vector<2x256xf32>
    %168 = arith.addf %164, %167 : vector<2x256xf32>
    %c31 = arith.constant 31 : index
    %169 = memref.load %arg2[%c31] : memref<98xf32, #tpu.memory_space<smem>>
    %170 = vector.broadcast %169 : f32 to vector<2x256xf32>
    %171 = arith.mulf %5, %170 : vector<2x256xf32>
    %172 = arith.addf %168, %171 : vector<2x256xf32>
    %c32 = arith.constant 32 : index
    %173 = memref.load %arg2[%c32] : memref<98xf32, #tpu.memory_space<smem>>
    %174 = vector.broadcast %173 : f32 to vector<2x256xf32>
    %175 = arith.mulf %25, %174 : vector<2x256xf32>
    %176 = arith.addf %172, %175 : vector<2x256xf32>
    %c33 = arith.constant 33 : index
    %177 = memref.load %arg2[%c33] : memref<98xf32, #tpu.memory_space<smem>>
    %178 = vector.broadcast %177 : f32 to vector<2x256xf32>
    %179 = arith.mulf %29, %178 : vector<2x256xf32>
    %180 = arith.addf %176, %179 : vector<2x256xf32>
    %c34 = arith.constant 34 : index
    %181 = memref.load %arg2[%c34] : memref<98xf32, #tpu.memory_space<smem>>
    %182 = vector.broadcast %181 : f32 to vector<2x256xf32>
    %183 = arith.mulf %33, %182 : vector<2x256xf32>
    %184 = arith.addf %180, %183 : vector<2x256xf32>
    %c240_i32 = arith.constant 240 : i32
    %185 = tpu.dynamic_rotate %184 by %c240_i32 dim 1 : vector<2x256xf32>, i32 -> vector<2x256xf32>
    %186 = vector.extract_strided_slice %6 {offsets = [4, 0], sizes = [1, 256], strides = [1, 1]} : vector<7x256xf32> to vector<1x256xf32>
    %187 = vector.broadcast %186 : vector<1x256xf32> to vector<2x256xf32>
    %188 = arith.mulf %185, %187 : vector<2x256xf32>
    %189 = arith.addf %157, %188 : vector<2x256xf32>
    %c35 = arith.constant 35 : index
    %190 = memref.load %arg2[%c35] : memref<98xf32, #tpu.memory_space<smem>>
    %191 = vector.broadcast %190 : f32 to vector<2x256xf32>
    %192 = arith.mulf %13, %191 : vector<2x256xf32>
    %c36 = arith.constant 36 : index
    %193 = memref.load %arg2[%c36] : memref<98xf32, #tpu.memory_space<smem>>
    %194 = vector.broadcast %193 : f32 to vector<2x256xf32>
    %195 = arith.mulf %17, %194 : vector<2x256xf32>
    %196 = arith.addf %192, %195 : vector<2x256xf32>
    %c37 = arith.constant 37 : index
    %197 = memref.load %arg2[%c37] : memref<98xf32, #tpu.memory_space<smem>>
    %198 = vector.broadcast %197 : f32 to vector<2x256xf32>
    %199 = arith.mulf %21, %198 : vector<2x256xf32>
    %200 = arith.addf %196, %199 : vector<2x256xf32>
    %c38 = arith.constant 38 : index
    %201 = memref.load %arg2[%c38] : memref<98xf32, #tpu.memory_space<smem>>
    %202 = vector.broadcast %201 : f32 to vector<2x256xf32>
    %203 = arith.mulf %5, %202 : vector<2x256xf32>
    %204 = arith.addf %200, %203 : vector<2x256xf32>
    %c39 = arith.constant 39 : index
    %205 = memref.load %arg2[%c39] : memref<98xf32, #tpu.memory_space<smem>>
    %206 = vector.broadcast %205 : f32 to vector<2x256xf32>
    %207 = arith.mulf %25, %206 : vector<2x256xf32>
    %208 = arith.addf %204, %207 : vector<2x256xf32>
    %c40 = arith.constant 40 : index
    %209 = memref.load %arg2[%c40] : memref<98xf32, #tpu.memory_space<smem>>
    %210 = vector.broadcast %209 : f32 to vector<2x256xf32>
    %211 = arith.mulf %29, %210 : vector<2x256xf32>
    %212 = arith.addf %208, %211 : vector<2x256xf32>
    %c41 = arith.constant 41 : index
    %213 = memref.load %arg2[%c41] : memref<98xf32, #tpu.memory_space<smem>>
    %214 = vector.broadcast %213 : f32 to vector<2x256xf32>
    %215 = arith.mulf %33, %214 : vector<2x256xf32>
    %216 = arith.addf %212, %215 : vector<2x256xf32>
    %c224_i32 = arith.constant 224 : i32
    %217 = tpu.dynamic_rotate %216 by %c224_i32 dim 1 : vector<2x256xf32>, i32 -> vector<2x256xf32>
    %218 = vector.extract_strided_slice %6 {offsets = [5, 0], sizes = [1, 256], strides = [1, 1]} : vector<7x256xf32> to vector<1x256xf32>
    %219 = vector.broadcast %218 : vector<1x256xf32> to vector<2x256xf32>
    %220 = arith.mulf %217, %219 : vector<2x256xf32>
    %221 = arith.addf %189, %220 : vector<2x256xf32>
    %c42 = arith.constant 42 : index
    %222 = memref.load %arg2[%c42] : memref<98xf32, #tpu.memory_space<smem>>
    %223 = vector.broadcast %222 : f32 to vector<2x256xf32>
    %224 = arith.mulf %13, %223 : vector<2x256xf32>
    %c43 = arith.constant 43 : index
    %225 = memref.load %arg2[%c43] : memref<98xf32, #tpu.memory_space<smem>>
    %226 = vector.broadcast %225 : f32 to vector<2x256xf32>
    %227 = arith.mulf %17, %226 : vector<2x256xf32>
    %228 = arith.addf %224, %227 : vector<2x256xf32>
    %c44 = arith.constant 44 : index
    %229 = memref.load %arg2[%c44] : memref<98xf32, #tpu.memory_space<smem>>
    %230 = vector.broadcast %229 : f32 to vector<2x256xf32>
    %231 = arith.mulf %21, %230 : vector<2x256xf32>
    %232 = arith.addf %228, %231 : vector<2x256xf32>
    %c45 = arith.constant 45 : index
    %233 = memref.load %arg2[%c45] : memref<98xf32, #tpu.memory_space<smem>>
    %234 = vector.broadcast %233 : f32 to vector<2x256xf32>
    %235 = arith.mulf %5, %234 : vector<2x256xf32>
    %236 = arith.addf %232, %235 : vector<2x256xf32>
    %c46 = arith.constant 46 : index
    %237 = memref.load %arg2[%c46] : memref<98xf32, #tpu.memory_space<smem>>
    %238 = vector.broadcast %237 : f32 to vector<2x256xf32>
    %239 = arith.mulf %25, %238 : vector<2x256xf32>
    %240 = arith.addf %236, %239 : vector<2x256xf32>
    %c47 = arith.constant 47 : index
    %241 = memref.load %arg2[%c47] : memref<98xf32, #tpu.memory_space<smem>>
    %242 = vector.broadcast %241 : f32 to vector<2x256xf32>
    %243 = arith.mulf %29, %242 : vector<2x256xf32>
    %244 = arith.addf %240, %243 : vector<2x256xf32>
    %c48 = arith.constant 48 : index
    %245 = memref.load %arg2[%c48] : memref<98xf32, #tpu.memory_space<smem>>
    %246 = vector.broadcast %245 : f32 to vector<2x256xf32>
    %247 = arith.mulf %33, %246 : vector<2x256xf32>
    %248 = arith.addf %244, %247 : vector<2x256xf32>
    %c208_i32 = arith.constant 208 : i32
    %249 = tpu.dynamic_rotate %248 by %c208_i32 dim 1 : vector<2x256xf32>, i32 -> vector<2x256xf32>
    %250 = vector.extract_strided_slice %6 {offsets = [6, 0], sizes = [1, 256], strides = [1, 1]} : vector<7x256xf32> to vector<1x256xf32>
    %251 = vector.broadcast %250 : vector<1x256xf32> to vector<2x256xf32>
    %252 = arith.mulf %249, %251 : vector<2x256xf32>
    %253 = arith.addf %221, %252 : vector<2x256xf32>
    %c3_i32_13 = arith.constant 3 : i32
    %254 = tpu.dynamic_rotate %3 by %c3_i32_13 dim 1 : vector<2x256xf32>, i32 -> vector<2x256xf32>
    %255 = vector.extract_strided_slice %7 {offsets = [0, 0], sizes = [1, 256], strides = [1, 1]} : vector<7x256xf32> to vector<1x256xf32>
    %256 = vector.broadcast %255 : vector<1x256xf32> to vector<2x256xf32>
    %257 = arith.mulf %254, %256 : vector<2x256xf32>
    %c2_i32_14 = arith.constant 2 : i32
    %258 = tpu.dynamic_rotate %3 by %c2_i32_14 dim 1 : vector<2x256xf32>, i32 -> vector<2x256xf32>
    %259 = vector.extract_strided_slice %7 {offsets = [1, 0], sizes = [1, 256], strides = [1, 1]} : vector<7x256xf32> to vector<1x256xf32>
    %260 = vector.broadcast %259 : vector<1x256xf32> to vector<2x256xf32>
    %261 = arith.mulf %258, %260 : vector<2x256xf32>
    %c1_i32_15 = arith.constant 1 : i32
    %262 = tpu.dynamic_rotate %3 by %c1_i32_15 dim 1 : vector<2x256xf32>, i32 -> vector<2x256xf32>
    %263 = vector.extract_strided_slice %7 {offsets = [2, 0], sizes = [1, 256], strides = [1, 1]} : vector<7x256xf32> to vector<1x256xf32>
    %264 = vector.broadcast %263 : vector<1x256xf32> to vector<2x256xf32>
    %265 = arith.mulf %262, %264 : vector<2x256xf32>
    %c255_i32_16 = arith.constant 255 : i32
    %266 = tpu.dynamic_rotate %3 by %c255_i32_16 dim 1 : vector<2x256xf32>, i32 -> vector<2x256xf32>
    %267 = vector.extract_strided_slice %7 {offsets = [4, 0], sizes = [1, 256], strides = [1, 1]} : vector<7x256xf32> to vector<1x256xf32>
    %268 = vector.broadcast %267 : vector<1x256xf32> to vector<2x256xf32>
    %269 = arith.mulf %266, %268 : vector<2x256xf32>
    %c254_i32_17 = arith.constant 254 : i32
    %270 = tpu.dynamic_rotate %3 by %c254_i32_17 dim 1 : vector<2x256xf32>, i32 -> vector<2x256xf32>
    %271 = vector.extract_strided_slice %7 {offsets = [5, 0], sizes = [1, 256], strides = [1, 1]} : vector<7x256xf32> to vector<1x256xf32>
    %272 = vector.broadcast %271 : vector<1x256xf32> to vector<2x256xf32>
    %273 = arith.mulf %270, %272 : vector<2x256xf32>
    %c253_i32_18 = arith.constant 253 : i32
    %274 = tpu.dynamic_rotate %3 by %c253_i32_18 dim 1 : vector<2x256xf32>, i32 -> vector<2x256xf32>
    %275 = vector.extract_strided_slice %7 {offsets = [6, 0], sizes = [1, 256], strides = [1, 1]} : vector<7x256xf32> to vector<1x256xf32>
    %276 = vector.broadcast %275 : vector<1x256xf32> to vector<2x256xf32>
    %277 = arith.mulf %274, %276 : vector<2x256xf32>
    %c49 = arith.constant 49 : index
    %278 = memref.load %arg2[%c49] : memref<98xf32, #tpu.memory_space<smem>>
    %279 = vector.broadcast %278 : f32 to vector<2x256xf32>
    %280 = arith.mulf %257, %279 : vector<2x256xf32>
    %c50 = arith.constant 50 : index
    %281 = memref.load %arg2[%c50] : memref<98xf32, #tpu.memory_space<smem>>
    %282 = vector.broadcast %281 : f32 to vector<2x256xf32>
    %283 = arith.mulf %261, %282 : vector<2x256xf32>
    %284 = arith.addf %280, %283 : vector<2x256xf32>
    %c51 = arith.constant 51 : index
    %285 = memref.load %arg2[%c51] : memref<98xf32, #tpu.memory_space<smem>>
    %286 = vector.broadcast %285 : f32 to vector<2x256xf32>
    %287 = arith.mulf %265, %286 : vector<2x256xf32>
    %288 = arith.addf %284, %287 : vector<2x256xf32>
    %c52 = arith.constant 52 : index
    %289 = memref.load %arg2[%c52] : memref<98xf32, #tpu.memory_space<smem>>
    %290 = vector.broadcast %289 : f32 to vector<2x256xf32>
    %291 = arith.mulf %3, %290 : vector<2x256xf32>
    %292 = arith.addf %288, %291 : vector<2x256xf32>
    %c53 = arith.constant 53 : index
    %293 = memref.load %arg2[%c53] : memref<98xf32, #tpu.memory_space<smem>>
    %294 = vector.broadcast %293 : f32 to vector<2x256xf32>
    %295 = arith.mulf %269, %294 : vector<2x256xf32>
    %296 = arith.addf %292, %295 : vector<2x256xf32>
    %c54 = arith.constant 54 : index
    %297 = memref.load %arg2[%c54] : memref<98xf32, #tpu.memory_space<smem>>
    %298 = vector.broadcast %297 : f32 to vector<2x256xf32>
    %299 = arith.mulf %273, %298 : vector<2x256xf32>
    %300 = arith.addf %296, %299 : vector<2x256xf32>
    %c55 = arith.constant 55 : index
    %301 = memref.load %arg2[%c55] : memref<98xf32, #tpu.memory_space<smem>>
    %302 = vector.broadcast %301 : f32 to vector<2x256xf32>
    %303 = arith.mulf %277, %302 : vector<2x256xf32>
    %304 = arith.addf %300, %303 : vector<2x256xf32>
    %c48_i32_19 = arith.constant 48 : i32
    %305 = tpu.dynamic_rotate %304 by %c48_i32_19 dim 1 : vector<2x256xf32>, i32 -> vector<2x256xf32>
    %306 = vector.extract_strided_slice %6 {offsets = [0, 0], sizes = [1, 256], strides = [1, 1]} : vector<7x256xf32> to vector<1x256xf32>
    %307 = vector.broadcast %306 : vector<1x256xf32> to vector<2x256xf32>
    %308 = arith.mulf %305, %307 : vector<2x256xf32>
    %309 = arith.addf %253, %308 : vector<2x256xf32>
    %c56 = arith.constant 56 : index
    %310 = memref.load %arg2[%c56] : memref<98xf32, #tpu.memory_space<smem>>
    %311 = vector.broadcast %310 : f32 to vector<2x256xf32>
    %312 = arith.mulf %257, %311 : vector<2x256xf32>
    %c57 = arith.constant 57 : index
    %313 = memref.load %arg2[%c57] : memref<98xf32, #tpu.memory_space<smem>>
    %314 = vector.broadcast %313 : f32 to vector<2x256xf32>
    %315 = arith.mulf %261, %314 : vector<2x256xf32>
    %316 = arith.addf %312, %315 : vector<2x256xf32>
    %c58 = arith.constant 58 : index
    %317 = memref.load %arg2[%c58] : memref<98xf32, #tpu.memory_space<smem>>
    %318 = vector.broadcast %317 : f32 to vector<2x256xf32>
    %319 = arith.mulf %265, %318 : vector<2x256xf32>
    %320 = arith.addf %316, %319 : vector<2x256xf32>
    %c59 = arith.constant 59 : index
    %321 = memref.load %arg2[%c59] : memref<98xf32, #tpu.memory_space<smem>>
    %322 = vector.broadcast %321 : f32 to vector<2x256xf32>
    %323 = arith.mulf %3, %322 : vector<2x256xf32>
    %324 = arith.addf %320, %323 : vector<2x256xf32>
    %c60 = arith.constant 60 : index
    %325 = memref.load %arg2[%c60] : memref<98xf32, #tpu.memory_space<smem>>
    %326 = vector.broadcast %325 : f32 to vector<2x256xf32>
    %327 = arith.mulf %269, %326 : vector<2x256xf32>
    %328 = arith.addf %324, %327 : vector<2x256xf32>
    %c61 = arith.constant 61 : index
    %329 = memref.load %arg2[%c61] : memref<98xf32, #tpu.memory_space<smem>>
    %330 = vector.broadcast %329 : f32 to vector<2x256xf32>
    %331 = arith.mulf %273, %330 : vector<2x256xf32>
    %332 = arith.addf %328, %331 : vector<2x256xf32>
    %c62 = arith.constant 62 : index
    %333 = memref.load %arg2[%c62] : memref<98xf32, #tpu.memory_space<smem>>
    %334 = vector.broadcast %333 : f32 to vector<2x256xf32>
    %335 = arith.mulf %277, %334 : vector<2x256xf32>
    %336 = arith.addf %332, %335 : vector<2x256xf32>
    %c32_i32_20 = arith.constant 32 : i32
    %337 = tpu.dynamic_rotate %336 by %c32_i32_20 dim 1 : vector<2x256xf32>, i32 -> vector<2x256xf32>
    %338 = vector.extract_strided_slice %6 {offsets = [1, 0], sizes = [1, 256], strides = [1, 1]} : vector<7x256xf32> to vector<1x256xf32>
    %339 = vector.broadcast %338 : vector<1x256xf32> to vector<2x256xf32>
    %340 = arith.mulf %337, %339 : vector<2x256xf32>
    %341 = arith.addf %309, %340 : vector<2x256xf32>
    %c63 = arith.constant 63 : index
    %342 = memref.load %arg2[%c63] : memref<98xf32, #tpu.memory_space<smem>>
    %343 = vector.broadcast %342 : f32 to vector<2x256xf32>
    %344 = arith.mulf %257, %343 : vector<2x256xf32>
    %c64 = arith.constant 64 : index
    %345 = memref.load %arg2[%c64] : memref<98xf32, #tpu.memory_space<smem>>
    %346 = vector.broadcast %345 : f32 to vector<2x256xf32>
    %347 = arith.mulf %261, %346 : vector<2x256xf32>
    %348 = arith.addf %344, %347 : vector<2x256xf32>
    %c65 = arith.constant 65 : index
    %349 = memref.load %arg2[%c65] : memref<98xf32, #tpu.memory_space<smem>>
    %350 = vector.broadcast %349 : f32 to vector<2x256xf32>
    %351 = arith.mulf %265, %350 : vector<2x256xf32>
    %352 = arith.addf %348, %351 : vector<2x256xf32>
    %c66 = arith.constant 66 : index
    %353 = memref.load %arg2[%c66] : memref<98xf32, #tpu.memory_space<smem>>
    %354 = vector.broadcast %353 : f32 to vector<2x256xf32>
    %355 = arith.mulf %3, %354 : vector<2x256xf32>
    %356 = arith.addf %352, %355 : vector<2x256xf32>
    %c67 = arith.constant 67 : index
    %357 = memref.load %arg2[%c67] : memref<98xf32, #tpu.memory_space<smem>>
    %358 = vector.broadcast %357 : f32 to vector<2x256xf32>
    %359 = arith.mulf %269, %358 : vector<2x256xf32>
    %360 = arith.addf %356, %359 : vector<2x256xf32>
    %c68 = arith.constant 68 : index
    %361 = memref.load %arg2[%c68] : memref<98xf32, #tpu.memory_space<smem>>
    %362 = vector.broadcast %361 : f32 to vector<2x256xf32>
    %363 = arith.mulf %273, %362 : vector<2x256xf32>
    %364 = arith.addf %360, %363 : vector<2x256xf32>
    %c69 = arith.constant 69 : index
    %365 = memref.load %arg2[%c69] : memref<98xf32, #tpu.memory_space<smem>>
    %366 = vector.broadcast %365 : f32 to vector<2x256xf32>
    %367 = arith.mulf %277, %366 : vector<2x256xf32>
    %368 = arith.addf %364, %367 : vector<2x256xf32>
    %c16_i32_21 = arith.constant 16 : i32
    %369 = tpu.dynamic_rotate %368 by %c16_i32_21 dim 1 : vector<2x256xf32>, i32 -> vector<2x256xf32>
    %370 = vector.extract_strided_slice %6 {offsets = [2, 0], sizes = [1, 256], strides = [1, 1]} : vector<7x256xf32> to vector<1x256xf32>
    %371 = vector.broadcast %370 : vector<1x256xf32> to vector<2x256xf32>
    %372 = arith.mulf %369, %371 : vector<2x256xf32>
    %373 = arith.addf %341, %372 : vector<2x256xf32>
    %c70 = arith.constant 70 : index
    %374 = memref.load %arg2[%c70] : memref<98xf32, #tpu.memory_space<smem>>
    %375 = vector.broadcast %374 : f32 to vector<2x256xf32>
    %376 = arith.mulf %257, %375 : vector<2x256xf32>
    %c71 = arith.constant 71 : index
    %377 = memref.load %arg2[%c71] : memref<98xf32, #tpu.memory_space<smem>>
    %378 = vector.broadcast %377 : f32 to vector<2x256xf32>
    %379 = arith.mulf %261, %378 : vector<2x256xf32>
    %380 = arith.addf %376, %379 : vector<2x256xf32>
    %c72 = arith.constant 72 : index
    %381 = memref.load %arg2[%c72] : memref<98xf32, #tpu.memory_space<smem>>
    %382 = vector.broadcast %381 : f32 to vector<2x256xf32>
    %383 = arith.mulf %265, %382 : vector<2x256xf32>
    %384 = arith.addf %380, %383 : vector<2x256xf32>
    %c73 = arith.constant 73 : index
    %385 = memref.load %arg2[%c73] : memref<98xf32, #tpu.memory_space<smem>>
    %386 = vector.broadcast %385 : f32 to vector<2x256xf32>
    %387 = arith.mulf %3, %386 : vector<2x256xf32>
    %388 = arith.addf %384, %387 : vector<2x256xf32>
    %c74 = arith.constant 74 : index
    %389 = memref.load %arg2[%c74] : memref<98xf32, #tpu.memory_space<smem>>
    %390 = vector.broadcast %389 : f32 to vector<2x256xf32>
    %391 = arith.mulf %269, %390 : vector<2x256xf32>
    %392 = arith.addf %388, %391 : vector<2x256xf32>
    %c75 = arith.constant 75 : index
    %393 = memref.load %arg2[%c75] : memref<98xf32, #tpu.memory_space<smem>>
    %394 = vector.broadcast %393 : f32 to vector<2x256xf32>
    %395 = arith.mulf %273, %394 : vector<2x256xf32>
    %396 = arith.addf %392, %395 : vector<2x256xf32>
    %c76 = arith.constant 76 : index
    %397 = memref.load %arg2[%c76] : memref<98xf32, #tpu.memory_space<smem>>
    %398 = vector.broadcast %397 : f32 to vector<2x256xf32>
    %399 = arith.mulf %277, %398 : vector<2x256xf32>
    %400 = arith.addf %396, %399 : vector<2x256xf32>
    %401 = arith.addf %373, %400 : vector<2x256xf32>
    %c77 = arith.constant 77 : index
    %402 = memref.load %arg2[%c77] : memref<98xf32, #tpu.memory_space<smem>>
    %403 = vector.broadcast %402 : f32 to vector<2x256xf32>
    %404 = arith.mulf %257, %403 : vector<2x256xf32>
    %c78 = arith.constant 78 : index
    %405 = memref.load %arg2[%c78] : memref<98xf32, #tpu.memory_space<smem>>
    %406 = vector.broadcast %405 : f32 to vector<2x256xf32>
    %407 = arith.mulf %261, %406 : vector<2x256xf32>
    %408 = arith.addf %404, %407 : vector<2x256xf32>
    %c79 = arith.constant 79 : index
    %409 = memref.load %arg2[%c79] : memref<98xf32, #tpu.memory_space<smem>>
    %410 = vector.broadcast %409 : f32 to vector<2x256xf32>
    %411 = arith.mulf %265, %410 : vector<2x256xf32>
    %412 = arith.addf %408, %411 : vector<2x256xf32>
    %c80 = arith.constant 80 : index
    %413 = memref.load %arg2[%c80] : memref<98xf32, #tpu.memory_space<smem>>
    %414 = vector.broadcast %413 : f32 to vector<2x256xf32>
    %415 = arith.mulf %3, %414 : vector<2x256xf32>
    %416 = arith.addf %412, %415 : vector<2x256xf32>
    %c81 = arith.constant 81 : index
    %417 = memref.load %arg2[%c81] : memref<98xf32, #tpu.memory_space<smem>>
    %418 = vector.broadcast %417 : f32 to vector<2x256xf32>
    %419 = arith.mulf %269, %418 : vector<2x256xf32>
    %420 = arith.addf %416, %419 : vector<2x256xf32>
    %c82 = arith.constant 82 : index
    %421 = memref.load %arg2[%c82] : memref<98xf32, #tpu.memory_space<smem>>
    %422 = vector.broadcast %421 : f32 to vector<2x256xf32>
    %423 = arith.mulf %273, %422 : vector<2x256xf32>
    %424 = arith.addf %420, %423 : vector<2x256xf32>
    %c83 = arith.constant 83 : index
    %425 = memref.load %arg2[%c83] : memref<98xf32, #tpu.memory_space<smem>>
    %426 = vector.broadcast %425 : f32 to vector<2x256xf32>
    %427 = arith.mulf %277, %426 : vector<2x256xf32>
    %428 = arith.addf %424, %427 : vector<2x256xf32>
    %c240_i32_22 = arith.constant 240 : i32
    %429 = tpu.dynamic_rotate %428 by %c240_i32_22 dim 1 : vector<2x256xf32>, i32 -> vector<2x256xf32>
    %430 = vector.extract_strided_slice %6 {offsets = [4, 0], sizes = [1, 256], strides = [1, 1]} : vector<7x256xf32> to vector<1x256xf32>
    %431 = vector.broadcast %430 : vector<1x256xf32> to vector<2x256xf32>
    %432 = arith.mulf %429, %431 : vector<2x256xf32>
    %433 = arith.addf %401, %432 : vector<2x256xf32>
    %c84 = arith.constant 84 : index
    %434 = memref.load %arg2[%c84] : memref<98xf32, #tpu.memory_space<smem>>
    %435 = vector.broadcast %434 : f32 to vector<2x256xf32>
    %436 = arith.mulf %257, %435 : vector<2x256xf32>
    %c85 = arith.constant 85 : index
    %437 = memref.load %arg2[%c85] : memref<98xf32, #tpu.memory_space<smem>>
    %438 = vector.broadcast %437 : f32 to vector<2x256xf32>
    %439 = arith.mulf %261, %438 : vector<2x256xf32>
    %440 = arith.addf %436, %439 : vector<2x256xf32>
    %c86 = arith.constant 86 : index
    %441 = memref.load %arg2[%c86] : memref<98xf32, #tpu.memory_space<smem>>
    %442 = vector.broadcast %441 : f32 to vector<2x256xf32>
    %443 = arith.mulf %265, %442 : vector<2x256xf32>
    %444 = arith.addf %440, %443 : vector<2x256xf32>
    %c87 = arith.constant 87 : index
    %445 = memref.load %arg2[%c87] : memref<98xf32, #tpu.memory_space<smem>>
    %446 = vector.broadcast %445 : f32 to vector<2x256xf32>
    %447 = arith.mulf %3, %446 : vector<2x256xf32>
    %448 = arith.addf %444, %447 : vector<2x256xf32>
    %c88 = arith.constant 88 : index
    %449 = memref.load %arg2[%c88] : memref<98xf32, #tpu.memory_space<smem>>
    %450 = vector.broadcast %449 : f32 to vector<2x256xf32>
    %451 = arith.mulf %269, %450 : vector<2x256xf32>
    %452 = arith.addf %448, %451 : vector<2x256xf32>
    %c89 = arith.constant 89 : index
    %453 = memref.load %arg2[%c89] : memref<98xf32, #tpu.memory_space<smem>>
    %454 = vector.broadcast %453 : f32 to vector<2x256xf32>
    %455 = arith.mulf %273, %454 : vector<2x256xf32>
    %456 = arith.addf %452, %455 : vector<2x256xf32>
    %c90 = arith.constant 90 : index
    %457 = memref.load %arg2[%c90] : memref<98xf32, #tpu.memory_space<smem>>
    %458 = vector.broadcast %457 : f32 to vector<2x256xf32>
    %459 = arith.mulf %277, %458 : vector<2x256xf32>
    %460 = arith.addf %456, %459 : vector<2x256xf32>
    %c224_i32_23 = arith.constant 224 : i32
    %461 = tpu.dynamic_rotate %460 by %c224_i32_23 dim 1 : vector<2x256xf32>, i32 -> vector<2x256xf32>
    %462 = vector.extract_strided_slice %6 {offsets = [5, 0], sizes = [1, 256], strides = [1, 1]} : vector<7x256xf32> to vector<1x256xf32>
    %463 = vector.broadcast %462 : vector<1x256xf32> to vector<2x256xf32>
    %464 = arith.mulf %461, %463 : vector<2x256xf32>
    %465 = arith.addf %433, %464 : vector<2x256xf32>
    %c91 = arith.constant 91 : index
    %466 = memref.load %arg2[%c91] : memref<98xf32, #tpu.memory_space<smem>>
    %467 = vector.broadcast %466 : f32 to vector<2x256xf32>
    %468 = arith.mulf %257, %467 : vector<2x256xf32>
    %c92 = arith.constant 92 : index
    %469 = memref.load %arg2[%c92] : memref<98xf32, #tpu.memory_space<smem>>
    %470 = vector.broadcast %469 : f32 to vector<2x256xf32>
    %471 = arith.mulf %261, %470 : vector<2x256xf32>
    %472 = arith.addf %468, %471 : vector<2x256xf32>
    %c93 = arith.constant 93 : index
    %473 = memref.load %arg2[%c93] : memref<98xf32, #tpu.memory_space<smem>>
    %474 = vector.broadcast %473 : f32 to vector<2x256xf32>
    %475 = arith.mulf %265, %474 : vector<2x256xf32>
    %476 = arith.addf %472, %475 : vector<2x256xf32>
    %c94 = arith.constant 94 : index
    %477 = memref.load %arg2[%c94] : memref<98xf32, #tpu.memory_space<smem>>
    %478 = vector.broadcast %477 : f32 to vector<2x256xf32>
    %479 = arith.mulf %3, %478 : vector<2x256xf32>
    %480 = arith.addf %476, %479 : vector<2x256xf32>
    %c95 = arith.constant 95 : index
    %481 = memref.load %arg2[%c95] : memref<98xf32, #tpu.memory_space<smem>>
    %482 = vector.broadcast %481 : f32 to vector<2x256xf32>
    %483 = arith.mulf %269, %482 : vector<2x256xf32>
    %484 = arith.addf %480, %483 : vector<2x256xf32>
    %c96 = arith.constant 96 : index
    %485 = memref.load %arg2[%c96] : memref<98xf32, #tpu.memory_space<smem>>
    %486 = vector.broadcast %485 : f32 to vector<2x256xf32>
    %487 = arith.mulf %273, %486 : vector<2x256xf32>
    %488 = arith.addf %484, %487 : vector<2x256xf32>
    %c97 = arith.constant 97 : index
    %489 = memref.load %arg2[%c97] : memref<98xf32, #tpu.memory_space<smem>>
    %490 = vector.broadcast %489 : f32 to vector<2x256xf32>
    %491 = arith.mulf %277, %490 : vector<2x256xf32>
    %492 = arith.addf %488, %491 : vector<2x256xf32>
    %c208_i32_24 = arith.constant 208 : i32
    %493 = tpu.dynamic_rotate %492 by %c208_i32_24 dim 1 : vector<2x256xf32>, i32 -> vector<2x256xf32>
    %494 = vector.extract_strided_slice %6 {offsets = [6, 0], sizes = [1, 256], strides = [1, 1]} : vector<7x256xf32> to vector<1x256xf32>
    %495 = vector.broadcast %494 : vector<1x256xf32> to vector<2x256xf32>
    %496 = arith.mulf %493, %495 : vector<2x256xf32>
    %497 = arith.addf %465, %496 : vector<2x256xf32>
    %498 = arith.negf %497 : vector<2x256xf32>
    %499 = math.exp %498 : vector<2x256xf32>
    %cst_25 = arith.constant 1.000000e+00 : f32
    %500 = vector.broadcast %cst_25 : f32 to vector<2x256xf32>
    %501 = arith.addf %500, %499 : vector<2x256xf32>
    %502 = arith.divf %500, %501 : vector<2x256xf32>
    %503 = vector.shape_cast %502 : vector<2x256xf32> to vector<2x1x256xf32>
    %c0_26 = arith.constant 0 : index
    %c0_27 = arith.constant 0 : index
    %c0_28 = arith.constant 0 : index
    %504 = vector.load %arg7[%c0_26, %c0_27, %c0_28] : memref<2x1x256xf32, #tpu.memory_space<vmem>>, vector<2x1x256xf32>
    tpu.vector_store %arg7[%c0_26, %c0_27, %c0_28], %503 {strides = array<i32>} : memref<2x1x256xf32, #tpu.memory_space<vmem>>, vector<2x1x256xf32>,
    return
  }
  func.func @transform_0(%arg0: i32, %arg1: i32) -> i32 {
    %c0_i32 = arith.constant 0 : i32
    %c0_i32_0 = arith.constant 0 : i32
    return %c0_i32 : i32
  }
  func.func @transform_1(%arg0: i32, %arg1: i32) -> i32 {
    %c0_i32 = arith.constant 0 : i32
    %c0_i32_0 = arith.constant 0 : i32
    return %c0_i32 : i32
  }
  func.func @transform_2(%arg0: i32, %arg1: i32) -> (i32, i32) {
    %c0_i32 = arith.constant 0 : i32
    %c0_i32_0 = arith.constant 0 : i32
    %c0_i32_1 = arith.constant 0 : i32
    return %c0_i32, %c0_i32_0 : i32, i32
  }
  func.func @transform_3(%arg0: i32, %arg1: i32) -> (i32, i32) {
    %c0_i32 = arith.constant 0 : i32
    %c0_i32_0 = arith.constant 0 : i32
    %c0_i32_1 = arith.constant 0 : i32
    return %c0_i32, %c0_i32_0 : i32, i32
  }
  func.func @transform_4(%arg0: i32, %arg1: i32) -> (i32, i32, i32) {
    %c0_i32 = arith.constant 0 : i32
    %c0_i32_0 = arith.constant 0 : i32
    return %arg0, %arg1, %c0_i32 : i32, i32, i32
  }
  func.func @transform_5(%arg0: i32, %arg1: i32) -> (i32, i32, i32) {
    %c0_i32 = arith.constant 0 : i32
    %c0_i32_0 = arith.constant 0 : i32
    %c0_i32_1 = arith.constant 0 : i32
    return %arg0, %c0_i32, %c0_i32_0 : i32, i32, i32
  }
}

</mosaic_0001>

<llo_original>
// kernel: tpu_custom_call.1
$region0: #{tpu_custom_call.1}
  #allocation0 [shape = 'u32[]', space=smem, size = 0x4, offset = 0x4, fixed_abs, tag = 'smem constant byte address 0x4 - core index']
  #allocation1 [shape = 'u32[144,128]{1,0:T(1,128)}', space=vmem, size = 0x12000, scoped, tag = 'internal scratch']
  #allocation2 [shape = 'f32[2,256]{1,0:T(2,128)}', space=vmem, size = 0x800, scoped, tag = 'scratch operand']
  #allocation3 [shape = 'f32[2,256]{1,0:T(2,128)}', space=vmem, size = 0x800, scoped, tag = 'scratch operand']
  #allocation4 [shape = 'f32[1]{0:T(128)S(6)}', space=smem, size = 0x200, scoped, tag = 'scoped memory for tpu_custom_call.1']
  %s0 = inlined_call_operand.vmem [shape: f32[98], index: 0, kind: input, shape index: {}]
  %s1 = inlined_call_operand.<no memory space> [shape: f32[1], index: 1, kind: input, shape index: {}]
  %s2 = inlined_call_operand.hbm [shape: f32[7,256], index: 2, kind: input, shape index: {}]
  %s3 = inlined_call_operand.hbm [shape: f32[7,256], index: 3, kind: input, shape index: {}]
  %s4 = inlined_call_operand.hbm [shape: f32[2,4,256], index: 4, kind: input, shape index: {}]
  %s5 = inlined_call_operand.hbm [shape: f32[2,1,256], index: 5, kind: output, shape index: {}]
  %s6 = sld [smem:[#allocation0]]
  $region46: #{tpu_custom_call.1} parent=0
    _
  %s8 = ssub.s32 1, %s6
  %s9 = scalar_select 0, %s8, %s6
  %10 = sst [smem:[#allocation4]] %s1
  $region1: #{tpu_custom_call.1} parent=0
    #allocation5 [shape = 'u8[512]{0}', space=smem, size = 0x200, scoped, tag = 'input window, operand 0, single buffered']
    #allocation6 [shape = 's32[1]{0}', space=sflag, size = 0x4, scoped, tag = 'scoped memory for tpu_custom_call.1']
    #allocation7 [shape = 's32[1]{0}', space=sflag, size = 0x4, scoped, tag = 'scoped memory for tpu_custom_call.1']
    #allocation8 [shape = 's32[1]{0}', space=sflag, size = 0x4, scoped, tag = 'scoped memory for tpu_custom_call.1']
    #allocation9 [shape = 'u8[8192]{0}', space=vmem, size = 0x2000, scoped, tag = 'input window, operand 2, single buffered']
    #allocation10 [shape = 'u8[8192]{0}', space=vmem, size = 0x2000, scoped, tag = 'input window, operand 3, single buffered']
    #allocation11 [shape = 's32[1]{0}', space=sflag, size = 0x4, scoped, tag = 'scoped memory for tpu_custom_call.1']
    #allocation12 [shape = 'u8[8192]{0}', space=vmem, size = 0x2000, scoped, tag = 'input window, operand 4, single buffered']
    #allocation13 [shape = 'u8[2048]{0}', space=vmem, size = 0x800, scoped, tag = 'output window, operand 0, single buffered']
    %11 = vsyncpa [#allocation8], 0
    %12 = vsyncpa [#allocation6], 0
    %13 = vsyncpa [#allocation11], 0
    %14 = vsyncpa [#allocation7], 0
    // Predicated region
    $region2: #{tpu_custom_call.1} parent=1 // pred_check
      _
    $region3: #{tpu_custom_call.1} parent=1 // pred_check_branch
      %16 = sbr.rel (0) target = $region5
    $region4: #{tpu_custom_call.1} parent=1 // pred_region
      %s18 = ssub.s32 16, 16
      %19 = vsyncadd [#allocation8], %s18
      %s21 = sshll.u32 %s0, 4
      %s22 = int_to_ptr.vmem [resolvable:$true] %s21
      %24 = dma.vmem_to_smem %s22, 16, [#allocation5], [#allocation8]
    $region5: #{tpu_custom_call.1} parent=1 // pred_fallthru
      _
    // Predicated region
    $region6: #{tpu_custom_call.1} parent=1 // pred_check
      _
    $region7: #{tpu_custom_call.1} parent=1 // pred_check_branch
      %26 = sbr.rel (0) target = $region9
    $region8: #{tpu_custom_call.1} parent=1 // pred_region
      _
    $region9: #{tpu_custom_call.1} parent=1 // pred_fallthru
      _
    // Predicated region
    $region10: #{tpu_custom_call.1} parent=1 // pred_check
      _
    $region11: #{tpu_custom_call.1} parent=1 // pred_check_branch
      %28 = sbr.rel (0) target = $region13
    $region12: #{tpu_custom_call.1} parent=1 // pred_region
      %s30 = ssub.s32 256, 256
      %31 = vsyncadd [#allocation6], %s30
      %s33 = sshll.u32 [#allocation9], 4
      %s34 = int_to_ptr.vmem [resolvable:$true] %s33
      %36 = dma.hbm_to_vmem [thread:$0]  %s2, 256, %s34, [#allocation6]
    $region13: #{tpu_custom_call.1} parent=1 // pred_fallthru
      _
    // Predicated region
    $region14: #{tpu_custom_call.1} parent=1 // pred_check
      _
    $region15: #{tpu_custom_call.1} parent=1 // pred_check_branch
      %38 = sbr.rel (0) target = $region17
    $region16: #{tpu_custom_call.1} parent=1 // pred_region
      %s40 = ssub.s32 256, 256
      %41 = vsyncadd [#allocation11], %s40
      %s43 = sshll.u32 [#allocation10], 4
      %s44 = int_to_ptr.vmem [resolvable:$true] %s43
      %46 = dma.hbm_to_vmem [thread:$0]  %s3, 256, %s44, [#allocation11]
    $region17: #{tpu_custom_call.1} parent=1 // pred_fallthru
      _
    // Predicated region
    $region18: #{tpu_custom_call.1} parent=1 // pred_check
      _
    $region19: #{tpu_custom_call.1} parent=1 // pred_check_branch
      %48 = sbr.rel (0) target = $region21
    $region20: #{tpu_custom_call.1} parent=1 // pred_region
      %s50 = ssub.s32 256, 256
      %51 = vsyncadd [#allocation11], %s50
      %s52 = sshll.u32 [#allocation12], 4
      %s53 = int_to_ptr.vmem [resolvable:$true] %s52
      %58 = dma.hbm_to_vmem [thread:$0]  %s4, 256, %s53, [#allocation11], 128, 128, 8
    $region21: #{tpu_custom_call.1} parent=1 // pred_fallthru
      _
    // Predicated region
    $region22: #{tpu_custom_call.1} parent=1 // pred_check
      _
    $region23: #{tpu_custom_call.1} parent=1 // pred_check_branch
      %60 = sbr.rel (0) target = $region25
    $region24: #{tpu_custom_call.1} parent=1 // pred_region
      %61 = dma.done [#allocation8], 16
    $region25: #{tpu_custom_call.1} parent=1 // pred_fallthru
      _
    // Predicated region
    $region26: #{tpu_custom_call.1} parent=1 // pred_check
      _
    $region27: #{tpu_custom_call.1} parent=1 // pred_check_branch
      %63 = sbr.rel (0) target = $region29
    $region28: #{tpu_custom_call.1} parent=1 // pred_region
      %64 = dma.done [#allocation6], 256
    $region29: #{tpu_custom_call.1} parent=1 // pred_fallthru
      _
    // Predicated region
    $region30: #{tpu_custom_call.1} parent=1 // pred_check
      _
    $region31: #{tpu_custom_call.1} parent=1 // pred_check_branch
      %66 = sbr.rel (0) target = $region33
    $region32: #{tpu_custom_call.1} parent=1 // pred_region
      %67 = dma.done [#allocation11], 256
    $region33: #{tpu_custom_call.1} parent=1 // pred_fallthru
      _
    // Predicated region
    $region34: #{tpu_custom_call.1} parent=1 // pred_check
      _
    $region35: #{tpu_custom_call.1} parent=1 // pred_check_branch
      %69 = sbr.rel (0) target = $region37
    $region36: #{tpu_custom_call.1} parent=1 // pred_region
      %70 = dma.done [#allocation11], 256
    $region37: #{tpu_custom_call.1} parent=1 // pred_fallthru
      _
    %71 = sfence
    %v72 = vld [vmem:[#allocation12] sm:$0xff]
    %v73 = vld [vmem:[#allocation12 + $0x8] sm:$0xff]
    %v76 = vcombine.high %v72, %v72
    %v77 = vcombine.high %v73, %v73
    %vm80 = vcmask 1043456
    %v81 = vsel %vm80, %v72, 0.0
    %v82 = vrot.slane %v81, 4
    %v83 = vadd.f32 %v81, %v82
    %v84 = vrot.slane %v83, 2
    %v85 = vadd.f32 %v83, %v84
    %v86 = vrot.slane %v85, 1
    %v87 = vadd.f32 %v85, %v86
    %v88 = vsel %vm80, %v76, 0.0
    %v89 = vrot.slane %v88, 4
    %v90 = vadd.f32 %v88, %v89
    %v91 = vrot.slane %v90, 2
    %v92 = vadd.f32 %v90, %v91
    %v93 = vrot.slane %v92, 1
    %v94 = vadd.f32 %v92, %v93
    %v95 = vsel %vm80, %v73, 0.0
    %v96 = vrot.slane %v95, 4
    %v97 = vadd.f32 %v95, %v96
    %v98 = vrot.slane %v97, 2
    %v99 = vadd.f32 %v97, %v98
    %v100 = vrot.slane %v99, 1
    %v101 = vadd.f32 %v99, %v100
    %v102 = vsel %vm80, %v77, 0.0
    %v103 = vrot.slane %v102, 4
    %v104 = vadd.f32 %v102, %v103
    %v105 = vrot.slane %v104, 2
    %v106 = vadd.f32 %v104, %v105
    %v107 = vrot.slane %v106, 1
    %v108 = vadd.f32 %v106, %v107
    %v109 = vsel %vm80, %v72, -inf
    %v110 = vrot.slane %v109, 4
    %v111 = vmax.f32 %v109, %v110
    %v112 = vrot.slane %v111, 2
    %v113 = vmax.f32 %v111, %v112
    %v114 = vrot.slane %v113, 1
    %v115 = vmax.f32 %v113, %v114
    %v116 = vsel %vm80, %v76, -inf
    %v117 = vrot.slane %v116, 4
    %v118 = vmax.f32 %v116, %v117
    %v119 = vrot.slane %v118, 2
    %v120 = vmax.f32 %v118, %v119
    %v121 = vrot.slane %v120, 1
    %v122 = vmax.f32 %v120, %v121
    %v123 = vsel %vm80, %v73, -inf
    %v124 = vrot.slane %v123, 4
    %v125 = vmax.f32 %v123, %v124
    %v126 = vrot.slane %v125, 2
    %v127 = vmax.f32 %v125, %v126
    %v128 = vrot.slane %v127, 1
    %v129 = vmax.f32 %v127, %v128
    %v130 = vsel %vm80, %v77, -inf
    %v131 = vrot.slane %v130, 4
    %v132 = vmax.f32 %v130, %v131
    %v133 = vrot.slane %v132, 2
    %v134 = vmax.f32 %v132, %v133
    %v135 = vrot.slane %v134, 1
    %v136 = vmax.f32 %v134, %v135
    %v137 = vmul.f32 %v87, 0.25
    %v138 = vmul.f32 %v94, 0.25
    %v139 = vmul.f32 %v101, 0.25
    %v140 = vmul.f32 %v108, 0.25
    %v141 = vld [vmem:[#allocation9] sm:$0x7f]
    %v142 = vld [vmem:[#allocation9 + $0x8] sm:$0x7f]
    %v143 = vld [vmem:[#allocation10] sm:$0x7f]
    %v144 = vld [vmem:[#allocation10 + $0x8] sm:$0x7f]
    %s145 = sld [smem:[#allocation4]]
    %v146 = vstv %s145
    %vm151 = vcmask 1041409
    %v152 = vsel %vm151, %v139, %v137
    %v153 = vsel %vm151, %v140, %v138
    %156 = vrot.lane.b32.xlu0 %v152, 3
    %v157 = vpop.permute.xlu0 %156
    %158 = vrot.lane.b32.xlu0 %v153, 3
    %v159 = vpop.permute.xlu0 %158
    %v160 = vlaneseq
    %v161 = vand.u32 %v160, 127
    %vm162 = vcmp.lt.s32.totalorder %v161, 3
    %v163 = vsel %vm162, %v157, %v159
    %v164 = vsel %vm162, %v159, %v157
    %v165 = vlaneseq
    %v166 = vshrl.u32 %v165, 7
    %v167 = vsub.s32 0, %v166
    %v168 = vrot.slane %v143, %v167
    %v169 = vlaneseq
    %v170 = vshrl.u32 %v169, 7
    %v171 = vsub.s32 0, %v170
    %v172 = vrot.slane %v144, %v171
    %v173 = vmul.f32 %v164, %v168
    %v174 = vmul.f32 %v163, %v172
    %175 = vrot.lane.b32.xlu0 %v152, 2
    %v176 = vpop.permute.xlu0 %175
    %177 = vrot.lane.b32.xlu0 %v153, 2
    %v178 = vpop.permute.xlu0 %177
    %vm179 = vcmp.lt.s32.totalorder %v161, 2
    %v180 = vsel %vm179, %v176, %v178
    %v181 = vsel %vm179, %v178, %v176
    %v182 = vlaneseq
    %v183 = vshrl.u32 %v182, 7
    %v184 = vsub.s32 1, %v183
    %v185 = vrot.slane %v143, %v184
    %v186 = vlaneseq
    %v187 = vshrl.u32 %v186, 7
    %v188 = vsub.s32 1, %v187
    %v189 = vrot.slane %v144, %v188
    %v190 = vmul.f32 %v181, %v185
    %v191 = vmul.f32 %v180, %v189
    %192 = vrot.lane.b32.xlu0 %v152, 1
    %v193 = vpop.permute.xlu0 %192
    %194 = vrot.lane.b32.xlu0 %v153, 1
    %v195 = vpop.permute.xlu0 %194
    %vm196 = vcmp.lt.s32.totalorder %v161, 1
    %v197 = vsel %vm196, %v193, %v195
    %v198 = vsel %vm196, %v195, %v193
    %v199 = vlaneseq
    %v200 = vshrl.u32 %v199, 7
    %v201 = vsub.s32 2, %v200
    %v202 = vrot.slane %v143, %v201
    %v203 = vlaneseq
    %v204 = vshrl.u32 %v203, 7
    %v205 = vsub.s32 2, %v204
    %v206 = vrot.slane %v144, %v205
    %v207 = vmul.f32 %v198, %v202
    %v208 = vmul.f32 %v197, %v206
    %209 = vrot.lane.b32.xlu0 %v152, 127
    %v210 = vpop.permute.xlu0 %209
    %211 = vrot.lane.b32.xlu0 %v153, 127
    %v212 = vpop.permute.xlu0 %211
    %vm213 = vcmp.lt.s32.totalorder %v161, 127
    %v214 = vsel %vm213, %v210, %v212
    %v215 = vsel %vm213, %v212, %v210
    %v216 = vlaneseq
    %v217 = vshrl.u32 %v216, 7
    %v218 = vsub.s32 4, %v217
    %v219 = vrot.slane %v143, %v218
    %v220 = vlaneseq
    %v221 = vshrl.u32 %v220, 7
    %v222 = vsub.s32 4, %v221
    %v223 = vrot.slane %v144, %v222
    %v224 = vmul.f32 %v214, %v219
    %v225 = vmul.f32 %v215, %v223
    %226 = vrot.lane.b32.xlu0 %v152, 126
    %v227 = vpop.permute.xlu0 %226
    %228 = vrot.lane.b32.xlu0 %v153, 126
    %v229 = vpop.permute.xlu0 %228
    %vm230 = vcmp.lt.s32.totalorder %v161, 126
    %v231 = vsel %vm230, %v227, %v229
    %v232 = vsel %vm230, %v229, %v227
    %v233 = vlaneseq
    %v234 = vshrl.u32 %v233, 7
    %v235 = vsub.s32 5, %v234
    %v236 = vrot.slane %v143, %v235
    %v237 = vlaneseq
    %v238 = vshrl.u32 %v237, 7
    %v239 = vsub.s32 5, %v238
    %v240 = vrot.slane %v144, %v239
    %v241 = vmul.f32 %v231, %v236
    %v242 = vmul.f32 %v232, %v240
    %243 = vrot.lane.b32.xlu0 %v152, 125
    %v244 = vpop.permute.xlu0 %243
    %245 = vrot.lane.b32.xlu0 %v153, 125
    %v246 = vpop.permute.xlu0 %245
    %vm247 = vcmp.lt.s32.totalorder %v161, 125
    %v248 = vsel %vm247, %v244, %v246
    %v249 = vsel %vm247, %v246, %v244
    %v250 = vlaneseq
    %v251 = vshrl.u32 %v250, 7
    %v252 = vsub.s32 6, %v251
    %v253 = vrot.slane %v143, %v252
    %v254 = vlaneseq
    %v255 = vshrl.u32 %v254, 7
    %v256 = vsub.s32 6, %v255
    %v257 = vrot.slane %v144, %v256
    %v258 = vmul.f32 %v248, %v253
    %v259 = vmul.f32 %v249, %v257
    %s260 = sld [smem:[#allocation5]]
    %v261 = vstv %s260
    %v262 = vmul.f32 %v173, %v261
    %v263 = vmul.f32 %v174, %v261
    %s264 = sld [smem:[#allocation5 + $0x1]]
    %v265 = vstv %s264
    %v266 = vmul.f32 %v190, %v265
    %v267 = vmul.f32 %v191, %v265
    %v268 = vadd.f32 %v262, %v266
    %v269 = vadd.f32 %v263, %v267
    %s270 = sld [smem:[#allocation5 + $0x2]]
    %v271 = vstv %s270
    %v272 = vmul.f32 %v207, %v271
    %v273 = vmul.f32 %v208, %v271
    %v274 = vadd.f32 %v268, %v272
    %v275 = vadd.f32 %v269, %v273
    %s276 = sld [smem:[#allocation5 + $0x3]]
    %v277 = vstv %s276
    %v278 = vmul.f32 %v137, %v277
    %v279 = vmul.f32 %v138, %v277
    %v280 = vmul.f32 %v139, %v277
    %v281 = vmul.f32 %v140, %v277
    %v286 = vsel %vm151, %v280, %v278
    %v287 = vsel %vm151, %v281, %v279
    %v290 = vadd.f32 %v274, %v286
    %v291 = vadd.f32 %v275, %v287
    %s292 = sld [smem:[#allocation5 + $0x4]]
    %v293 = vstv %s292
    %v294 = vmul.f32 %v224, %v293
    %v295 = vmul.f32 %v225, %v293
    %v296 = vadd.f32 %v290, %v294
    %v297 = vadd.f32 %v291, %v295
    %s298 = sld [smem:[#allocation5 + $0x5]]
    %v299 = vstv %s298
    %v300 = vmul.f32 %v241, %v299
    %v301 = vmul.f32 %v242, %v299
    %v302 = vadd.f32 %v296, %v300
    %v303 = vadd.f32 %v297, %v301
    %s304 = sld [smem:[#allocation5 + $0x6]]
    %v305 = vstv %s304
    %v306 = vmul.f32 %v258, %v305
    %v307 = vmul.f32 %v259, %v305
    %v308 = vadd.f32 %v302, %v306
    %v309 = vadd.f32 %v303, %v307
    %310 = vrot.lane.b32.xlu0 %v308, 48
    %v311 = vpop.permute.xlu0 %310
    %312 = vrot.lane.b32.xlu0 %v309, 48
    %v313 = vpop.permute.xlu0 %312
    %vm314 = vcmp.lt.s32.totalorder %v161, 48
    %v315 = vsel %vm314, %v311, %v313
    %v316 = vsel %vm314, %v313, %v311
    %v317 = vlaneseq
    %v318 = vshrl.u32 %v317, 7
    %v319 = vsub.s32 0, %v318
    %v320 = vrot.slane %v141, %v319
    %v321 = vlaneseq
    %v322 = vshrl.u32 %v321, 7
    %v323 = vsub.s32 0, %v322
    %v324 = vrot.slane %v142, %v323
    %v325 = vmul.f32 %v316, %v320
    %v326 = vmul.f32 %v315, %v324
    %v327 = vadd.f32 %v146, %v325
    %v328 = vadd.f32 %v146, %v326
    %s329 = sld [smem:[#allocation5 + $0x7]]
    %v330 = vstv %s329
    %v331 = vmul.f32 %v173, %v330
    %v332 = vmul.f32 %v174, %v330
    %s333 = sld [smem:[#allocation5 + $0x8]]
    %v334 = vstv %s333
    %v335 = vmul.f32 %v190, %v334
    %v336 = vmul.f32 %v191, %v334
    %v337 = vadd.f32 %v331, %v335
    %v338 = vadd.f32 %v332, %v336
    %s339 = sld [smem:[#allocation5 + $0x9]]
    %v340 = vstv %s339
    %v341 = vmul.f32 %v207, %v340
    %v342 = vmul.f32 %v208, %v340
    %v343 = vadd.f32 %v337, %v341
    %v344 = vadd.f32 %v338, %v342
    %s345 = sld [smem:[#allocation5 + $0xa]]
    %v346 = vstv %s345
    %v347 = vmul.f32 %v137, %v346
    %v348 = vmul.f32 %v138, %v346
    %v349 = vmul.f32 %v139, %v346
    %v350 = vmul.f32 %v140, %v346
    %v355 = vsel %vm151, %v349, %v347
    %v356 = vsel %vm151, %v350, %v348
    %v359 = vadd.f32 %v343, %v355
    %v360 = vadd.f32 %v344, %v356
    %s361 = sld [smem:[#allocation5 + $0xb]]
    %v362 = vstv %s361
    %v363 = vmul.f32 %v224, %v362
    %v364 = vmul.f32 %v225, %v362
    %v365 = vadd.f32 %v359, %v363
    %v366 = vadd.f32 %v360, %v364
    %s367 = sld [smem:[#allocation5 + $0xc]]
    %v368 = vstv %s367
    %v369 = vmul.f32 %v241, %v368
    %v370 = vmul.f32 %v242, %v368
    %v371 = vadd.f32 %v365, %v369
    %v372 = vadd.f32 %v366, %v370
    %s373 = sld [smem:[#allocation5 + $0xd]]
    %v374 = vstv %s373
    %v375 = vmul.f32 %v258, %v374
    %v376 = vmul.f32 %v259, %v374
    %v377 = vadd.f32 %v371, %v375
    %v378 = vadd.f32 %v372, %v376
    %379 = vrot.lane.b32.xlu0 %v377, 32
    %v380 = vpop.permute.xlu0 %379
    %381 = vrot.lane.b32.xlu0 %v378, 32
    %v382 = vpop.permute.xlu0 %381
    %vm383 = vcmp.lt.s32.totalorder %v161, 32
    %v384 = vsel %vm383, %v380, %v382
    %v385 = vsel %vm383, %v382, %v380
    %v386 = vlaneseq
    %v387 = vshrl.u32 %v386, 7
    %v388 = vsub.s32 1, %v387
    %v389 = vrot.slane %v141, %v388
    %v390 = vlaneseq
    %v391 = vshrl.u32 %v390, 7
    %v392 = vsub.s32 1, %v391
    %v393 = vrot.slane %v142, %v392
    %v394 = vmul.f32 %v385, %v389
    %v395 = vmul.f32 %v384, %v393
    %v396 = vadd.f32 %v327, %v394
    %v397 = vadd.f32 %v328, %v395
    %s398 = sld [smem:[#allocation5 + $0xe]]
    %v399 = vstv %s398
    %v400 = vmul.f32 %v173, %v399
    %v401 = vmul.f32 %v174, %v399
    %s402 = sld [smem:[#allocation5 + $0xf]]
    %v403 = vstv %s402
    %v404 = vmul.f32 %v190, %v403
    %v405 = vmul.f32 %v191, %v403
    %v406 = vadd.f32 %v400, %v404
    %v407 = vadd.f32 %v401, %v405
    %s408 = sld [smem:[#allocation5 + $0x10]]
    %v409 = vstv %s408
    %v410 = vmul.f32 %v207, %v409
    %v411 = vmul.f32 %v208, %v409
    %v412 = vadd.f32 %v406, %v410
    %v413 = vadd.f32 %v407, %v411
    %s414 = sld [smem:[#allocation5 + $0x11]]
    %v415 = vstv %s414
    %v416 = vmul.f32 %v137, %v415
    %v417 = vmul.f32 %v138, %v415
    %v418 = vmul.f32 %v139, %v415
    %v419 = vmul.f32 %v140, %v415
    %v424 = vsel %vm151, %v418, %v416
    %v425 = vsel %vm151, %v419, %v417
    %v428 = vadd.f32 %v412, %v424
    %v429 = vadd.f32 %v413, %v425
    %s430 = sld [smem:[#allocation5 + $0x12]]
    %v431 = vstv %s430
    %v432 = vmul.f32 %v224, %v431
    %v433 = vmul.f32 %v225, %v431
    %v434 = vadd.f32 %v428, %v432
    %v435 = vadd.f32 %v429, %v433
    %s436 = sld [smem:[#allocation5 + $0x13]]
    %v437 = vstv %s436
    %v438 = vmul.f32 %v241, %v437
    %v439 = vmul.f32 %v242, %v437
    %v440 = vadd.f32 %v434, %v438
    %v441 = vadd.f32 %v435, %v439
    %s442 = sld [smem:[#allocation5 + $0x14]]
    %v443 = vstv %s442
    %v444 = vmul.f32 %v258, %v443
    %v445 = vmul.f32 %v259, %v443
    %v446 = vadd.f32 %v440, %v444
    %v447 = vadd.f32 %v441, %v445
    %448 = vrot.lane.b32.xlu0 %v446, 16
    %v449 = vpop.permute.xlu0 %448
    %450 = vrot.lane.b32.xlu0 %v447, 16
    %v451 = vpop.permute.xlu0 %450
    %vm452 = vcmp.lt.s32.totalorder %v161, 16
    %v453 = vsel %vm452, %v449, %v451
    %v454 = vsel %vm452, %v451, %v449
    %v455 = vlaneseq
    %v456 = vshrl.u32 %v455, 7
    %v457 = vsub.s32 2, %v456
    %v458 = vrot.slane %v141, %v457
    %v459 = vlaneseq
    %v460 = vshrl.u32 %v459, 7
    %v461 = vsub.s32 2, %v460
    %v462 = vrot.slane %v142, %v461
    %v463 = vmul.f32 %v454, %v458
    %v464 = vmul.f32 %v453, %v462
    %v465 = vadd.f32 %v396, %v463
    %v466 = vadd.f32 %v397, %v464
    %s467 = sld [smem:[#allocation5 + $0x15]]
    %v468 = vstv %s467
    %v469 = vmul.f32 %v173, %v468
    %v470 = vmul.f32 %v174, %v468
    %s471 = sld [smem:[#allocation5 + $0x16]]
    %v472 = vstv %s471
    %v473 = vmul.f32 %v190, %v472
    %v474 = vmul.f32 %v191, %v472
    %v475 = vadd.f32 %v469, %v473
    %v476 = vadd.f32 %v470, %v474
    %s477 = sld [smem:[#allocation5 + $0x17]]
    %v478 = vstv %s477
    %v479 = vmul.f32 %v207, %v478
    %v480 = vmul.f32 %v208, %v478
    %v481 = vadd.f32 %v475, %v479
    %v482 = vadd.f32 %v476, %v480
    %s483 = sld [smem:[#allocation5 + $0x18]]
    %v484 = vstv %s483
    %v485 = vmul.f32 %v137, %v484
    %v486 = vmul.f32 %v138, %v484
    %v487 = vmul.f32 %v139, %v484
    %v488 = vmul.f32 %v140, %v484
    %v493 = vsel %vm151, %v487, %v485
    %v494 = vsel %vm151, %v488, %v486
    %v497 = vadd.f32 %v481, %v493
    %v498 = vadd.f32 %v482, %v494
    %s499 = sld [smem:[#allocation5 + $0x19]]
    %v500 = vstv %s499
    %v501 = vmul.f32 %v224, %v500
    %v502 = vmul.f32 %v225, %v500
    %v503 = vadd.f32 %v497, %v501
    %v504 = vadd.f32 %v498, %v502
    %s505 = sld [smem:[#allocation5 + $0x1a]]
    %v506 = vstv %s505
    %v507 = vmul.f32 %v241, %v506
    %v508 = vmul.f32 %v242, %v506
    %v509 = vadd.f32 %v503, %v507
    %v510 = vadd.f32 %v504, %v508
    %s511 = sld [smem:[#allocation5 + $0x1b]]
    %v512 = vstv %s511
    %v513 = vmul.f32 %v258, %v512
    %v514 = vmul.f32 %v259, %v512
    %v515 = vadd.f32 %v509, %v513
    %v516 = vadd.f32 %v510, %v514
    %v517 = vadd.f32 %v465, %v515
    %v518 = vadd.f32 %v466, %v516
    %s519 = sld [smem:[#allocation5 + $0x1c]]
    %v520 = vstv %s519
    %v521 = vmul.f32 %v173, %v520
    %v522 = vmul.f32 %v174, %v520
    %s523 = sld [smem:[#allocation5 + $0x1d]]
    %v524 = vstv %s523
    %v525 = vmul.f32 %v190, %v524
    %v526 = vmul.f32 %v191, %v524
    %v527 = vadd.f32 %v521, %v525
    %v528 = vadd.f32 %v522, %v526
    %s529 = sld [smem:[#allocation5 + $0x1e]]
    %v530 = vstv %s529
    %v531 = vmul.f32 %v207, %v530
    %v532 = vmul.f32 %v208, %v530
    %v533 = vadd.f32 %v527, %v531
    %v534 = vadd.f32 %v528, %v532
    %s535 = sld [smem:[#allocation5 + $0x1f]]
    %v536 = vstv %s535
    %v537 = vmul.f32 %v137, %v536
    %v538 = vmul.f32 %v138, %v536
    %v539 = vmul.f32 %v139, %v536
    %v540 = vmul.f32 %v140, %v536
    %v545 = vsel %vm151, %v539, %v537
    %v546 = vsel %vm151, %v540, %v538
    %v549 = vadd.f32 %v533, %v545
    %v550 = vadd.f32 %v534, %v546
    %s551 = sld [smem:[#allocation5 + $0x20]]
    %v552 = vstv %s551
    %v553 = vmul.f32 %v224, %v552
    %v554 = vmul.f32 %v225, %v552
    %v555 = vadd.f32 %v549, %v553
    %v556 = vadd.f32 %v550, %v554
    %s557 = sld [smem:[#allocation5 + $0x21]]
    %v558 = vstv %s557
    %v559 = vmul.f32 %v241, %v558
    %v560 = vmul.f32 %v242, %v558
    %v561 = vadd.f32 %v555, %v559
    %v562 = vadd.f32 %v556, %v560
    %s563 = sld [smem:[#allocation5 + $0x22]]
    %v564 = vstv %s563
    %v565 = vmul.f32 %v258, %v564
    %v566 = vmul.f32 %v259, %v564
    %v567 = vadd.f32 %v561, %v565
    %v568 = vadd.f32 %v562, %v566
    %569 = vrot.lane.b32.xlu0 %v567, 112
    %v570 = vpop.permute.xlu0 %569
    %571 = vrot.lane.b32.xlu0 %v568, 112
    %v572 = vpop.permute.xlu0 %571
    %vm573 = vcmp.lt.s32.totalorder %v161, 112
    %v574 = vsel %vm573, %v570, %v572
    %v575 = vsel %vm573, %v572, %v570
    %v576 = vlaneseq
    %v577 = vshrl.u32 %v576, 7
    %v578 = vsub.s32 4, %v577
    %v579 = vrot.slane %v141, %v578
    %v580 = vlaneseq
    %v581 = vshrl.u32 %v580, 7
    %v582 = vsub.s32 4, %v581
    %v583 = vrot.slane %v142, %v582
    %v584 = vmul.f32 %v574, %v579
    %v585 = vmul.f32 %v575, %v583
    %v586 = vadd.f32 %v517, %v584
    %v587 = vadd.f32 %v518, %v585
    %s588 = sld [smem:[#allocation5 + $0x23]]
    %v589 = vstv %s588
    %v590 = vmul.f32 %v173, %v589
    %v591 = vmul.f32 %v174, %v589
    %s592 = sld [smem:[#allocation5 + $0x24]]
    %v593 = vstv %s592
    %v594 = vmul.f32 %v190, %v593
    %v595 = vmul.f32 %v191, %v593
    %v596 = vadd.f32 %v590, %v594
    %v597 = vadd.f32 %v591, %v595
    %s598 = sld [smem:[#allocation5 + $0x25]]
    %v599 = vstv %s598
    %v600 = vmul.f32 %v207, %v599
    %v601 = vmul.f32 %v208, %v599
    %v602 = vadd.f32 %v596, %v600
    %v603 = vadd.f32 %v597, %v601
    %s604 = sld [smem:[#allocation5 + $0x26]]
    %v605 = vstv %s604
    %v606 = vmul.f32 %v137, %v605
    %v607 = vmul.f32 %v138, %v605
    %v608 = vmul.f32 %v139, %v605
    %v609 = vmul.f32 %v140, %v605
    %v614 = vsel %vm151, %v608, %v606
    %v615 = vsel %vm151, %v609, %v607
    %v618 = vadd.f32 %v602, %v614
    %v619 = vadd.f32 %v603, %v615
    %s620 = sld [smem:[#allocation5 + $0x27]]
    %v621 = vstv %s620
    %v622 = vmul.f32 %v224, %v621
    %v623 = vmul.f32 %v225, %v621
    %v624 = vadd.f32 %v618, %v622
    %v625 = vadd.f32 %v619, %v623
    %s626 = sld [smem:[#allocation5 + $0x28]]
    %v627 = vstv %s626
    %v628 = vmul.f32 %v241, %v627
    %v629 = vmul.f32 %v242, %v627
    %v630 = vadd.f32 %v624, %v628
    %v631 = vadd.f32 %v625, %v629
    %s632 = sld [smem:[#allocation5 + $0x29]]
    %v633 = vstv %s632
    %v634 = vmul.f32 %v258, %v633
    %v635 = vmul.f32 %v259, %v633
    %v636 = vadd.f32 %v630, %v634
    %v637 = vadd.f32 %v631, %v635
    %638 = vrot.lane.b32.xlu0 %v636, 96
    %v639 = vpop.permute.xlu0 %638
    %640 = vrot.lane.b32.xlu0 %v637, 96
    %v641 = vpop.permute.xlu0 %640
    %vm642 = vcmp.lt.s32.totalorder %v161, 96
    %v643 = vsel %vm642, %v639, %v641
    %v644 = vsel %vm642, %v641, %v639
    %v645 = vlaneseq
    %v646 = vshrl.u32 %v645, 7
    %v647 = vsub.s32 5, %v646
    %v648 = vrot.slane %v141, %v647
    %v649 = vlaneseq
    %v650 = vshrl.u32 %v649, 7
    %v651 = vsub.s32 5, %v650
    %v652 = vrot.slane %v142, %v651
    %v653 = vmul.f32 %v643, %v648
    %v654 = vmul.f32 %v644, %v652
    %v655 = vadd.f32 %v586, %v653
    %v656 = vadd.f32 %v587, %v654
    %s657 = sld [smem:[#allocation5 + $0x2a]]
    %v658 = vstv %s657
    %v659 = vmul.f32 %v173, %v658
    %v660 = vmul.f32 %v174, %v658
    %s661 = sld [smem:[#allocation5 + $0x2b]]
    %v662 = vstv %s661
    %v663 = vmul.f32 %v190, %v662
    %v664 = vmul.f32 %v191, %v662
    %v665 = vadd.f32 %v659, %v663
    %v666 = vadd.f32 %v660, %v664
    %s667 = sld [smem:[#allocation5 + $0x2c]]
    %v668 = vstv %s667
    %v669 = vmul.f32 %v207, %v668
    %v670 = vmul.f32 %v208, %v668
    %v671 = vadd.f32 %v665, %v669
    %v672 = vadd.f32 %v666, %v670
    %s673 = sld [smem:[#allocation5 + $0x2d]]
    %v674 = vstv %s673
    %v675 = vmul.f32 %v137, %v674
    %v676 = vmul.f32 %v138, %v674
    %v677 = vmul.f32 %v139, %v674
    %v678 = vmul.f32 %v140, %v674
    %v683 = vsel %vm151, %v677, %v675
    %v684 = vsel %vm151, %v678, %v676
    %v687 = vadd.f32 %v671, %v683
    %v688 = vadd.f32 %v672, %v684
    %s689 = sld [smem:[#allocation5 + $0x2e]]
    %v690 = vstv %s689
    %v691 = vmul.f32 %v224, %v690
    %v692 = vmul.f32 %v225, %v690
    %v693 = vadd.f32 %v687, %v691
    %v694 = vadd.f32 %v688, %v692
    %s695 = sld [smem:[#allocation5 + $0x2f]]
    %v696 = vstv %s695
    %v697 = vmul.f32 %v241, %v696
    %v698 = vmul.f32 %v242, %v696
    %v699 = vadd.f32 %v693, %v697
    %v700 = vadd.f32 %v694, %v698
    %s701 = sld [smem:[#allocation5 + $0x30]]
    %v702 = vstv %s701
    %v703 = vmul.f32 %v258, %v702
    %v704 = vmul.f32 %v259, %v702
    %v705 = vadd.f32 %v699, %v703
    %v706 = vadd.f32 %v700, %v704
    %707 = vrot.lane.b32.xlu0 %v705, 80
    %v708 = vpop.permute.xlu0 %707
    %709 = vrot.lane.b32.xlu0 %v706, 80
    %v710 = vpop.permute.xlu0 %709
    %vm711 = vcmp.lt.s32.totalorder %v161, 80
    %v712 = vsel %vm711, %v708, %v710
    %v713 = vsel %vm711, %v710, %v708
    %v714 = vlaneseq
    %v715 = vshrl.u32 %v714, 7
    %v716 = vsub.s32 6, %v715
    %v717 = vrot.slane %v141, %v716
    %v718 = vlaneseq
    %v719 = vshrl.u32 %v718, 7
    %v720 = vsub.s32 6, %v719
    %v721 = vrot.slane %v142, %v720
    %v722 = vmul.f32 %v712, %v717
    %v723 = vmul.f32 %v713, %v721
    %v724 = vadd.f32 %v655, %v722
    %v725 = vadd.f32 %v656, %v723
    %v730 = vsel %vm151, %v129, %v115
    %v731 = vsel %vm151, %v136, %v122
    %734 = vrot.lane.b32.xlu0 %v730, 3
    %v735 = vpop.permute.xlu0 %734
    %736 = vrot.lane.b32.xlu0 %v731, 3
    %v737 = vpop.permute.xlu0 %736
    %v738 = vsel %vm162, %v735, %v737
    %v739 = vsel %vm162, %v737, %v735
    %v740 = vmul.f32 %v739, %v168
    %v741 = vmul.f32 %v738, %v172
    %742 = vrot.lane.b32.xlu0 %v730, 2
    %v743 = vpop.permute.xlu0 %742
    %744 = vrot.lane.b32.xlu0 %v731, 2
    %v745 = vpop.permute.xlu0 %744
    %v746 = vsel %vm179, %v743, %v745
    %v747 = vsel %vm179, %v745, %v743
    %v748 = vmul.f32 %v747, %v185
    %v749 = vmul.f32 %v746, %v189
    %750 = vrot.lane.b32.xlu0 %v730, 1
    %v751 = vpop.permute.xlu0 %750
    %752 = vrot.lane.b32.xlu0 %v731, 1
    %v753 = vpop.permute.xlu0 %752
    %v754 = vsel %vm196, %v751, %v753
    %v755 = vsel %vm196, %v753, %v751
    %v756 = vmul.f32 %v755, %v202
    %v757 = vmul.f32 %v754, %v206
    %758 = vrot.lane.b32.xlu0 %v730, 127
    %v759 = vpop.permute.xlu0 %758
    %760 = vrot.lane.b32.xlu0 %v731, 127
    %v761 = vpop.permute.xlu0 %760
    %v762 = vsel %vm213, %v759, %v761
    %v763 = vsel %vm213, %v761, %v759
    %v764 = vmul.f32 %v762, %v219
    %v765 = vmul.f32 %v763, %v223
    %766 = vrot.lane.b32.xlu0 %v730, 126
    %v767 = vpop.permute.xlu0 %766
    %768 = vrot.lane.b32.xlu0 %v731, 126
    %v769 = vpop.permute.xlu0 %768
    %v770 = vsel %vm230, %v767, %v769
    %v771 = vsel %vm230, %v769, %v767
    %v772 = vmul.f32 %v770, %v236
    %v773 = vmul.f32 %v771, %v240
    %774 = vrot.lane.b32.xlu0 %v730, 125
    %v775 = vpop.permute.xlu0 %774
    %776 = vrot.lane.b32.xlu0 %v731, 125
    %v777 = vpop.permute.xlu0 %776
    %v778 = vsel %vm247, %v775, %v777
    %v779 = vsel %vm247, %v777, %v775
    %v780 = vmul.f32 %v778, %v253
    %v781 = vmul.f32 %v779, %v257
    %s782 = sld [smem:[#allocation5 + $0x31]]
    %v783 = vstv %s782
    %v784 = vmul.f32 %v740, %v783
    %v785 = vmul.f32 %v741, %v783
    %s786 = sld [smem:[#allocation5 + $0x32]]
    %v787 = vstv %s786
    %v788 = vmul.f32 %v748, %v787
    %v789 = vmul.f32 %v749, %v787
    %v790 = vadd.f32 %v784, %v788
    %v791 = vadd.f32 %v785, %v789
    %s792 = sld [smem:[#allocation5 + $0x33]]
    %v793 = vstv %s792
    %v794 = vmul.f32 %v756, %v793
    %v795 = vmul.f32 %v757, %v793
    %v796 = vadd.f32 %v790, %v794
    %v797 = vadd.f32 %v791, %v795
    %s798 = sld [smem:[#allocation5 + $0x34]]
    %v799 = vstv %s798
    %v800 = vmul.f32 %v115, %v799
    %v801 = vmul.f32 %v122, %v799
    %v802 = vmul.f32 %v129, %v799
    %v803 = vmul.f32 %v136, %v799
    %v808 = vsel %vm151, %v802, %v800
    %v809 = vsel %vm151, %v803, %v801
    %v812 = vadd.f32 %v796, %v808
    %v813 = vadd.f32 %v797, %v809
    %s814 = sld [smem:[#allocation5 + $0x35]]
    %v815 = vstv %s814
    %v816 = vmul.f32 %v764, %v815
    %v817 = vmul.f32 %v765, %v815
    %v818 = vadd.f32 %v812, %v816
    %v819 = vadd.f32 %v813, %v817
    %s820 = sld [smem:[#allocation5 + $0x36]]
    %v821 = vstv %s820
    %v822 = vmul.f32 %v772, %v821
    %v823 = vmul.f32 %v773, %v821
    %v824 = vadd.f32 %v818, %v822
    %v825 = vadd.f32 %v819, %v823
    %s826 = sld [smem:[#allocation5 + $0x37]]
    %v827 = vstv %s826
    %v828 = vmul.f32 %v780, %v827
    %v829 = vmul.f32 %v781, %v827
    %v830 = vadd.f32 %v824, %v828
    %v831 = vadd.f32 %v825, %v829
    %832 = vrot.lane.b32.xlu0 %v830, 48
    %v833 = vpop.permute.xlu0 %832
    %834 = vrot.lane.b32.xlu0 %v831, 48
    %v835 = vpop.permute.xlu0 %834
    %v836 = vsel %vm314, %v833, %v835
    %v837 = vsel %vm314, %v835, %v833
    %v838 = vmul.f32 %v837, %v320
    %v839 = vmul.f32 %v836, %v324
    %v840 = vadd.f32 %v724, %v838
    %v841 = vadd.f32 %v725, %v839
    %s842 = sld [smem:[#allocation5 + $0x38]]
    %v843 = vstv %s842
    %v844 = vmul.f32 %v740, %v843
    %v845 = vmul.f32 %v741, %v843
    %s846 = sld [smem:[#allocation5 + $0x39]]
    %v847 = vstv %s846
    %v848 = vmul.f32 %v748, %v847
    %v849 = vmul.f32 %v749, %v847
    %v850 = vadd.f32 %v844, %v848
    %v851 = vadd.f32 %v845, %v849
    %s852 = sld [smem:[#allocation5 + $0x3a]]
    %v853 = vstv %s852
    %v854 = vmul.f32 %v756, %v853
    %v855 = vmul.f32 %v757, %v853
    %v856 = vadd.f32 %v850, %v854
    %v857 = vadd.f32 %v851, %v855
    %s858 = sld [smem:[#allocation5 + $0x3b]]
    %v859 = vstv %s858
    %v860 = vmul.f32 %v115, %v859
    %v861 = vmul.f32 %v122, %v859
    %v862 = vmul.f32 %v129, %v859
    %v863 = vmul.f32 %v136, %v859
    %v868 = vsel %vm151, %v862, %v860
    %v869 = vsel %vm151, %v863, %v861
    %v872 = vadd.f32 %v856, %v868
    %v873 = vadd.f32 %v857, %v869
    %s874 = sld [smem:[#allocation5 + $0x3c]]
    %v875 = vstv %s874
    %v876 = vmul.f32 %v764, %v875
    %v877 = vmul.f32 %v765, %v875
    %v878 = vadd.f32 %v872, %v876
    %v879 = vadd.f32 %v873, %v877
    %s880 = sld [smem:[#allocation5 + $0x3d]]
    %v881 = vstv %s880
    %v882 = vmul.f32 %v772, %v881
    %v883 = vmul.f32 %v773, %v881
    %v884 = vadd.f32 %v878, %v882
    %v885 = vadd.f32 %v879, %v883
    %s886 = sld [smem:[#allocation5 + $0x3e]]
    %v887 = vstv %s886
    %v888 = vmul.f32 %v780, %v887
    %v889 = vmul.f32 %v781, %v887
    %v890 = vadd.f32 %v884, %v888
    %v891 = vadd.f32 %v885, %v889
    %892 = vrot.lane.b32.xlu0 %v890, 32
    %v893 = vpop.permute.xlu0 %892
    %894 = vrot.lane.b32.xlu0 %v891, 32
    %v895 = vpop.permute.xlu0 %894
    %v896 = vsel %vm383, %v893, %v895
    %v897 = vsel %vm383, %v895, %v893
    %v898 = vmul.f32 %v897, %v389
    %v899 = vmul.f32 %v896, %v393
    %v900 = vadd.f32 %v840, %v898
    %v901 = vadd.f32 %v841, %v899
    %s902 = sld [smem:[#allocation5 + $0x3f]]
    %v903 = vstv %s902
    %v904 = vmul.f32 %v740, %v903
    %v905 = vmul.f32 %v741, %v903
    %s906 = sld [smem:[#allocation5 + $0x40]]
    %v907 = vstv %s906
    %v908 = vmul.f32 %v748, %v907
    %v909 = vmul.f32 %v749, %v907
    %v910 = vadd.f32 %v904, %v908
    %v911 = vadd.f32 %v905, %v909
    %s912 = sld [smem:[#allocation5 + $0x41]]
    %v913 = vstv %s912
    %v914 = vmul.f32 %v756, %v913
    %v915 = vmul.f32 %v757, %v913
    %v916 = vadd.f32 %v910, %v914
    %v917 = vadd.f32 %v911, %v915
    %s918 = sld [smem:[#allocation5 + $0x42]]
    %v919 = vstv %s918
    %v920 = vmul.f32 %v115, %v919
    %v921 = vmul.f32 %v122, %v919
    %v922 = vmul.f32 %v129, %v919
    %v923 = vmul.f32 %v136, %v919
    %v928 = vsel %vm151, %v922, %v920
    %v929 = vsel %vm151, %v923, %v921
    %v932 = vadd.f32 %v916, %v928
    %v933 = vadd.f32 %v917, %v929
    %s934 = sld [smem:[#allocation5 + $0x43]]
    %v935 = vstv %s934
    %v936 = vmul.f32 %v764, %v935
    %v937 = vmul.f32 %v765, %v935
    %v938 = vadd.f32 %v932, %v936
    %v939 = vadd.f32 %v933, %v937
    %s940 = sld [smem:[#allocation5 + $0x44]]
    %v941 = vstv %s940
    %v942 = vmul.f32 %v772, %v941
    %v943 = vmul.f32 %v773, %v941
    %v944 = vadd.f32 %v938, %v942
    %v945 = vadd.f32 %v939, %v943
    %s946 = sld [smem:[#allocation5 + $0x45]]
    %v947 = vstv %s946
    %v948 = vmul.f32 %v780, %v947
    %v949 = vmul.f32 %v781, %v947
    %v950 = vadd.f32 %v944, %v948
    %v951 = vadd.f32 %v945, %v949
    %952 = vrot.lane.b32.xlu0 %v950, 16
    %v953 = vpop.permute.xlu0 %952
    %954 = vrot.lane.b32.xlu0 %v951, 16
    %v955 = vpop.permute.xlu0 %954
    %v956 = vsel %vm452, %v953, %v955
    %v957 = vsel %vm452, %v955, %v953
    %v958 = vmul.f32 %v957, %v458
    %v959 = vmul.f32 %v956, %v462
    %v960 = vadd.f32 %v900, %v958
    %v961 = vadd.f32 %v901, %v959
    %s962 = sld [smem:[#allocation5 + $0x46]]
    %v963 = vstv %s962
    %v964 = vmul.f32 %v740, %v963
    %v965 = vmul.f32 %v741, %v963
    %s966 = sld [smem:[#allocation5 + $0x47]]
    %v967 = vstv %s966
    %v968 = vmul.f32 %v748, %v967
    %v969 = vmul.f32 %v749, %v967
    %v970 = vadd.f32 %v964, %v968
    %v971 = vadd.f32 %v965, %v969
    %s972 = sld [smem:[#allocation5 + $0x48]]
    %v973 = vstv %s972
    %v974 = vmul.f32 %v756, %v973
    %v975 = vmul.f32 %v757, %v973
    %v976 = vadd.f32 %v970, %v974
    %v977 = vadd.f32 %v971, %v975
    %s978 = sld [smem:[#allocation5 + $0x49]]
    %v979 = vstv %s978
    %v980 = vmul.f32 %v115, %v979
    %v981 = vmul.f32 %v122, %v979
    %v982 = vmul.f32 %v129, %v979
    %v983 = vmul.f32 %v136, %v979
    %v988 = vsel %vm151, %v982, %v980
    %v989 = vsel %vm151, %v983, %v981
    %v992 = vadd.f32 %v976, %v988
    %v993 = vadd.f32 %v977, %v989
    %s994 = sld [smem:[#allocation5 + $0x4a]]
    %v995 = vstv %s994
    %v996 = vmul.f32 %v764, %v995
    %v997 = vmul.f32 %v765, %v995
    %v998 = vadd.f32 %v992, %v996
    %v999 = vadd.f32 %v993, %v997
    %s1000 = sld [smem:[#allocation5 + $0x4b]]
    %v1001 = vstv %s1000
    %v1002 = vmul.f32 %v772, %v1001
    %v1003 = vmul.f32 %v773, %v1001
    %v1004 = vadd.f32 %v998, %v1002
    %v1005 = vadd.f32 %v999, %v1003
    %s1006 = sld [smem:[#allocation5 + $0x4c]]
    %v1007 = vstv %s1006
    %v1008 = vmul.f32 %v780, %v1007
    %v1009 = vmul.f32 %v781, %v1007
    %v1010 = vadd.f32 %v1004, %v1008
    %v1011 = vadd.f32 %v1005, %v1009
    %v1012 = vadd.f32 %v960, %v1010
    %v1013 = vadd.f32 %v961, %v1011
    %s1014 = sld [smem:[#allocation5 + $0x4d]]
    %v1015 = vstv %s1014
    %v1016 = vmul.f32 %v740, %v1015
    %v1017 = vmul.f32 %v741, %v1015
    %s1018 = sld [smem:[#allocation5 + $0x4e]]
    %v1019 = vstv %s1018
    %v1020 = vmul.f32 %v748, %v1019
    %v1021 = vmul.f32 %v749, %v1019
    %v1022 = vadd.f32 %v1016, %v1020
    %v1023 = vadd.f32 %v1017, %v1021
    %s1024 = sld [smem:[#allocation5 + $0x4f]]
    %v1025 = vstv %s1024
    %v1026 = vmul.f32 %v756, %v1025
    %v1027 = vmul.f32 %v757, %v1025
    %v1028 = vadd.f32 %v1022, %v1026
    %v1029 = vadd.f32 %v1023, %v1027
    %s1030 = sld [smem:[#allocation5 + $0x50]]
    %v1031 = vstv %s1030
    %v1032 = vmul.f32 %v115, %v1031
    %v1033 = vmul.f32 %v122, %v1031
    %v1034 = vmul.f32 %v129, %v1031
    %v1035 = vmul.f32 %v136, %v1031
    %v1040 = vsel %vm151, %v1034, %v1032
    %v1041 = vsel %vm151, %v1035, %v1033
    %v1044 = vadd.f32 %v1028, %v1040
    %v1045 = vadd.f32 %v1029, %v1041
    %s1046 = sld [smem:[#allocation5 + $0x51]]
    %v1047 = vstv %s1046
    %v1048 = vmul.f32 %v764, %v1047
    %v1049 = vmul.f32 %v765, %v1047
    %v1050 = vadd.f32 %v1044, %v1048
    %v1051 = vadd.f32 %v1045, %v1049
    %s1052 = sld [smem:[#allocation5 + $0x52]]
    %v1053 = vstv %s1052
    %v1054 = vmul.f32 %v772, %v1053
    %v1055 = vmul.f32 %v773, %v1053
    %v1056 = vadd.f32 %v1050, %v1054
    %v1057 = vadd.f32 %v1051, %v1055
    %s1058 = sld [smem:[#allocation5 + $0x53]]
    %v1059 = vstv %s1058
    %v1060 = vmul.f32 %v780, %v1059
    %v1061 = vmul.f32 %v781, %v1059
    %v1062 = vadd.f32 %v1056, %v1060
    %v1063 = vadd.f32 %v1057, %v1061
    %1064 = vrot.lane.b32.xlu0 %v1062, 112
    %v1065 = vpop.permute.xlu0 %1064
    %1066 = vrot.lane.b32.xlu0 %v1063, 112
    %v1067 = vpop.permute.xlu0 %1066
    %v1068 = vsel %vm573, %v1065, %v1067
    %v1069 = vsel %vm573, %v1067, %v1065
    %v1070 = vmul.f32 %v1068, %v579
    %v1071 = vmul.f32 %v1069, %v583
    %v1072 = vadd.f32 %v1012, %v1070
    %v1073 = vadd.f32 %v1013, %v1071
    %s1074 = sld [smem:[#allocation5 + $0x54]]
    %v1075 = vstv %s1074
    %v1076 = vmul.f32 %v740, %v1075
    %v1077 = vmul.f32 %v741, %v1075
    %s1078 = sld [smem:[#allocation5 + $0x55]]
    %v1079 = vstv %s1078
    %v1080 = vmul.f32 %v748, %v1079
    %v1081 = vmul.f32 %v749, %v1079
    %v1082 = vadd.f32 %v1076, %v1080
    %v1083 = vadd.f32 %v1077, %v1081
    %s1084 = sld [smem:[#allocation5 + $0x56]]
    %v1085 = vstv %s1084
    %v1086 = vmul.f32 %v756, %v1085
    %v1087 = vmul.f32 %v757, %v1085
    %v1088 = vadd.f32 %v1082, %v1086
    %v1089 = vadd.f32 %v1083, %v1087
    %s1090 = sld [smem:[#allocation5 + $0x57]]
    %v1091 = vstv %s1090
    %v1092 = vmul.f32 %v115, %v1091
    %v1093 = vmul.f32 %v122, %v1091
    %v1094 = vmul.f32 %v129, %v1091
    %v1095 = vmul.f32 %v136, %v1091
    %v1100 = vsel %vm151, %v1094, %v1092
    %v1101 = vsel %vm151, %v1095, %v1093
    %v1104 = vadd.f32 %v1088, %v1100
    %v1105 = vadd.f32 %v1089, %v1101
    %s1106 = sld [smem:[#allocation5 + $0x58]]
    %v1107 = vstv %s1106
    %v1108 = vmul.f32 %v764, %v1107
    %v1109 = vmul.f32 %v765, %v1107
    %v1110 = vadd.f32 %v1104, %v1108
    %v1111 = vadd.f32 %v1105, %v1109
    %s1112 = sld [smem:[#allocation5 + $0x59]]
    %v1113 = vstv %s1112
    %v1114 = vmul.f32 %v772, %v1113
    %v1115 = vmul.f32 %v773, %v1113
    %v1116 = vadd.f32 %v1110, %v1114
    %v1117 = vadd.f32 %v1111, %v1115
    %s1118 = sld [smem:[#allocation5 + $0x5a]]
    %v1119 = vstv %s1118
    %v1120 = vmul.f32 %v780, %v1119
    %v1121 = vmul.f32 %v781, %v1119
    %v1122 = vadd.f32 %v1116, %v1120
    %v1123 = vadd.f32 %v1117, %v1121
    %1124 = vrot.lane.b32.xlu0 %v1122, 96
    %v1125 = vpop.permute.xlu0 %1124
    %1126 = vrot.lane.b32.xlu0 %v1123, 96
    %v1127 = vpop.permute.xlu0 %1126
    %v1128 = vsel %vm642, %v1125, %v1127
    %v1129 = vsel %vm642, %v1127, %v1125
    %v1130 = vmul.f32 %v1128, %v648
    %v1131 = vmul.f32 %v1129, %v652
    %v1132 = vadd.f32 %v1072, %v1130
    %v1133 = vadd.f32 %v1073, %v1131
    %s1134 = sld [smem:[#allocation5 + $0x5b]]
    %v1135 = vstv %s1134
    %v1136 = vmul.f32 %v740, %v1135
    %v1137 = vmul.f32 %v741, %v1135
    %s1138 = sld [smem:[#allocation5 + $0x5c]]
    %v1139 = vstv %s1138
    %v1140 = vmul.f32 %v748, %v1139
    %v1141 = vmul.f32 %v749, %v1139
    %v1142 = vadd.f32 %v1136, %v1140
    %v1143 = vadd.f32 %v1137, %v1141
    %s1144 = sld [smem:[#allocation5 + $0x5d]]
    %v1145 = vstv %s1144
    %v1146 = vmul.f32 %v756, %v1145
    %v1147 = vmul.f32 %v757, %v1145
    %v1148 = vadd.f32 %v1142, %v1146
    %v1149 = vadd.f32 %v1143, %v1147
    %s1150 = sld [smem:[#allocation5 + $0x5e]]
    %v1151 = vstv %s1150
    %v1152 = vmul.f32 %v115, %v1151
    %v1153 = vmul.f32 %v122, %v1151
    %v1154 = vmul.f32 %v129, %v1151
    %v1155 = vmul.f32 %v136, %v1151
    %v1160 = vsel %vm151, %v1154, %v1152
    %v1161 = vsel %vm151, %v1155, %v1153
    %v1164 = vadd.f32 %v1148, %v1160
    %v1165 = vadd.f32 %v1149, %v1161
    %s1166 = sld [smem:[#allocation5 + $0x5f]]
    %v1167 = vstv %s1166
    %v1168 = vmul.f32 %v764, %v1167
    %v1169 = vmul.f32 %v765, %v1167
    %v1170 = vadd.f32 %v1164, %v1168
    %v1171 = vadd.f32 %v1165, %v1169
    %s1172 = sld [smem:[#allocation5 + $0x60]]
    %v1173 = vstv %s1172
    %v1174 = vmul.f32 %v772, %v1173
    %v1175 = vmul.f32 %v773, %v1173
    %v1176 = vadd.f32 %v1170, %v1174
    %v1177 = vadd.f32 %v1171, %v1175
    %s1178 = sld [smem:[#allocation5 + $0x61]]
    %v1179 = vstv %s1178
    %v1180 = vmul.f32 %v780, %v1179
    %v1181 = vmul.f32 %v781, %v1179
    %v1182 = vadd.f32 %v1176, %v1180
    %v1183 = vadd.f32 %v1177, %v1181
    %1184 = vrot.lane.b32.xlu0 %v1182, 80
    %v1185 = vpop.permute.xlu0 %1184
    %1186 = vrot.lane.b32.xlu0 %v1183, 80
    %v1187 = vpop.permute.xlu0 %1186
    %v1188 = vsel %vm711, %v1185, %v1187
    %v1189 = vsel %vm711, %v1187, %v1185
    %v1190 = vmul.f32 %v1188, %v717
    %v1191 = vmul.f32 %v1189, %v721
    %v1192 = vadd.f32 %v1132, %v1190
    %v1193 = vadd.f32 %v1133, %v1191
    %v1194 = vxor.u32 %v1192, 2147483648
    %v1195 = vxor.u32 %v1193, 2147483648
    %v1196 = vmul.f32 %v1194, 1.442695
    %v1197 = vpow.pop %v1196
    %v1198 = vmul.f32 %v1195, 1.442695
    %v1199 = vpow.pop %v1198
    %v1200 = vadd.f32 %v1197, 1.0
    %v1201 = vadd.f32 %v1199, 1.0
    %v1202 = vrcp.pop %v1200
    %v1203 = vmul.f32 1.0, %v1202
    %v1204 = vrcp.pop %v1201
    %v1205 = vmul.f32 1.0, %v1204
    %v1208 = vcombine.low %v1203, %v1205
    %v1210 = vunpack.c.l.s4 1966171168
    %v1211 = vunpack.c.0.s8 %v1210
    %v1212 = vlaneseq
    %v1213 = vshrl.u32 %v1212, 7
    %v1214 = vsub.s32 %v1211, %v1213
    %v1215 = vrot.slane %v1208, %v1214
    %v1216 = vcombine.high %v1215, %v1215
    %v1218 = vunpack.c.l.s4 1966171168
    %v1219 = vunpack.c.0.s8 %v1218
    %v1220 = vlaneseq
    %v1221 = vshrl.u32 %v1220, 7
    %v1222 = vsub.s32 %v1219, %v1221
    %v1223 = vrot.slane %v1215, %v1222
    %v1225 = vunpack.c.l.s4 1966171168
    %v1226 = vunpack.c.0.s8 %v1225
    %v1227 = vlaneseq
    %v1228 = vshrl.u32 %v1227, 7
    %v1229 = vsub.s32 %v1226, %v1228
    %v1230 = vrot.slane %v1216, %v1229
    %v1233 = vlaneseq
    %vm1234 = vcmp.ge.s32.totalorder %v1233, 0
    %vm1235 = vcmp.lt.s32.totalorder %v1233, 256
    %vm1236 = vmand %vm1234, %vm1235
    %1237 = vst.msk [vmem:[#allocation13] sm:$0x3] %vm1236, %v1223
    %1238 = vst.msk [vmem:[#allocation13 + $0x2] sm:$0x3] %vm1236, %v1230
    // Predicated region
    $region38: #{tpu_custom_call.1} parent=1 // pred_check
      _
    $region39: #{tpu_custom_call.1} parent=1 // pred_check_branch
      %1240 = sbr.rel (0) target = $region41
    $region40: #{tpu_custom_call.1} parent=1 // pred_region
      %s1242 = ssub.s32 64, 64
      %1243 = vsyncadd [#allocation7], %s1242
      %s1244 = sshll.u32 [#allocation13], 4
      %s1245 = int_to_ptr.vmem [resolvable:$true] %s1244
      %1250 = dma.vmem_to_hbm [thread:$0]  %s1245, 64, %s5, [#allocation7], 32, 32, 2
    $region41: #{tpu_custom_call.1} parent=1 // pred_fallthru
      _
    // Predicated region
    $region42: #{tpu_custom_call.1} parent=1 // pred_check
      _
    $region43: #{tpu_custom_call.1} parent=1 // pred_check_branch
      %1252 = sbr.rel (0) target = $region45
    $region44: #{tpu_custom_call.1} parent=1 // pred_region
      %1253 = dma.done [#allocation7], 64
    $region45: #{tpu_custom_call.1} parent=1 // pred_fallthru
      _
    %1254 = vsyncpa [#allocation6], 1
    %1255 = vsyncpa [#allocation11], 1
    %1256 = vsyncpa [#allocation7], 1
    %1257 = vsyncpa [#allocation8], 1

</llo_original>
